<compile_context>
chip_gen: v7x
topology: tpu7x:2x2x1
jax: 0.10.0
libtpu: 0.0.40
codegen_flags: <defaults>
</compile_context>

<pallas_src>
import functools

import jax
import jax.numpy as jnp
from jax import lax
from jax.experimental import pallas as pl
from jax.experimental.pallas import tpu as pltpu


# Set to jnp.bfloat16 on v6e / v7x for higher MXU throughput + halved weight DMA.
# f32 default keeps exact PyTorch-matching numerics (accumulation is f32 either way).
MATMUL_DTYPE = jnp.float32


def _row_tile(n, preferred=256):
    """Largest row tile <= preferred that divides n and is a multiple of 8, else n."""
    if n <= preferred:
        return n
    for t in range(preferred, 0, -8):
        if n % t == 0:
            return t
    return n


def _pick_time_chunk(T, max_chunk=32):
    """Time-chunk size: divides T, small enough to keep the unrolled inner loop sane."""
    if T <= max_chunk:
        return T
    for c in range(max_chunk, 0, -1):
        if T % c == 0:
            return c
    return T


# ----------------------------------------------------------------------------
# Row-tiled matmul + bias (used for the hoisted LSTM input projections).
# ----------------------------------------------------------------------------
def _matmul_bias_kernel(x_ref, w_ref, b_ref, o_ref):
    o_ref[...] = (
        jnp.dot(x_ref[...].astype(MATMUL_DTYPE), w_ref[...].astype(MATMUL_DTYPE),
                preferred_element_type=jnp.float32)
        + b_ref[...]
    ).astype(o_ref.dtype)


def matmul_bias(x, w, b):
    """x: (N, K), w: (K, M), b: (1, M) -> (N, M) f32."""
    N, K = x.shape
    M = w.shape[1]
    tn = _row_tile(N)
    return pl.pallas_call(
        _matmul_bias_kernel,
        grid=(N // tn,),
        in_specs=[
            pl.BlockSpec((tn, K), lambda i: (i, 0)),
            pl.BlockSpec((K, M), lambda i: (0, 0)),
            pl.BlockSpec((1, M), lambda i: (0, 0)),
        ],
        out_specs=pl.BlockSpec((tn, M), lambda i: (i, 0)),
        out_shape=jax.ShapeDtypeStruct((N, M), jnp.float32),
        compiler_params=pltpu.CompilerParams(dimension_semantics=("parallel",)),
    )(x, w, b)


# ----------------------------------------------------------------------------
# LSTM recurrence kernel: grid over time chunks, inner unrolled loop over Tc steps.
# Input gx = x @ W_ih + (b_ih + b_hh) is precomputed (hoisted) per layer.
# PyTorch gate order: i, f, g, o.
# ----------------------------------------------------------------------------
def _lstm_recurrence_kernel(gx_ref, whh_ref, y_ref, hN_ref, cN_ref,
                            h_scr, c_scr, act_scr, *, Tc, H):
    chunk = pl.program_id(0)

    @pl.when(chunk == 0)
    def _init():
        h_scr[...] = jnp.zeros_like(h_scr)
        c_scr[...] = jnp.zeros_like(c_scr)

    # Loop-invariant weight load (hoisted out of the unrolled time loop).
    whh = whh_ref[...].astype(MATMUL_DTYPE)

    def step(t, carry):
        h = h_scr[...]                      # (B, H) f32
        c = c_scr[...]
        # Single MXU dot per step; the x-projection + bias is already in gx.
        g = gx_ref[t] + jnp.dot(h.astype(MATMUL_DTYPE), whh,
                                preferred_element_type=jnp.float32)   # (B, 4H)
        # TODO(synk): with H < 128 these gate slices cut inside a lane-vreg; pad H to a
        #             multiple of 128 at production sizes to make them free view offsets.
        i_g = jax.nn.sigmoid(g[:, 0 * H:1 * H])
        f_g = jax.nn.sigmoid(g[:, 1 * H:2 * H])
        g_g = jnp.tanh(g[:, 2 * H:3 * H])
        o_g = jax.nn.sigmoid(g[:, 3 * H:4 * H])

        c_new = f_g * c + i_g * g_g
        h_new = o_g * jnp.tanh(c_new)

        h_scr[...] = h_new
        c_scr[...] = c_new
        act_scr[t] = h_new                  # accumulate chunk output in VMEM
        return carry

    lax.fori_loop(0, Tc, step, 0, unroll=True)

    # One chunk-sized store instead of Tc per-step stores.
    y_ref[...] = act_scr[...]

    # Final states are only needed once, at the last chunk.
    @pl.when(chunk == pl.num_programs(0) - 1)
    def _final():
        hN_ref[...] = h_scr[...]
        cN_ref[...] = c_scr[...]


def lstm_layer(gx_tbg, whh, *, Tc):
    """gx_tbg: (T, B, 4H) precomputed x@W_ih + bias, time-major. whh: (H, 4H).

    Returns y (T, B, H), h_N (B, H), c_N (B, H)."""
    T, B, G4 = gx_tbg.shape
    H = whh.shape[0]
    assert G4 == 4 * H and T % Tc == 0
    n_chunks = T // Tc
    kernel = functools.partial(_lstm_recurrence_kernel, Tc=Tc, H=H)
    y, hN, cN = pl.pallas_call(
        kernel,
        grid=(n_chunks,),
        in_specs=[
            pl.BlockSpec((Tc, B, 4 * H), lambda c: (c, 0, 0)),
            pl.BlockSpec((H, 4 * H), lambda c: (0, 0)),
        ],
        out_specs=[
            pl.BlockSpec((Tc, B, H), lambda c: (c, 0, 0)),
            pl.BlockSpec((B, H), lambda c: (0, 0)),
            pl.BlockSpec((B, H), lambda c: (0, 0)),
        ],
        out_shape=[
            jax.ShapeDtypeStruct((T, B, H), jnp.float32),
            jax.ShapeDtypeStruct((B, H), jnp.float32),
            jax.ShapeDtypeStruct((B, H), jnp.float32),
        ],
        scratch_shapes=[
            pltpu.VMEM((B, H), jnp.float32),       # h state
            pltpu.VMEM((B, H), jnp.float32),       # c state
            pltpu.VMEM((Tc, B, H), jnp.float32),   # chunk activation slab
        ],
        compiler_params=pltpu.CompilerParams(dimension_semantics=("arbitrary",)),
    )(gx_tbg, whh)
    return y, hN, cN


# ----------------------------------------------------------------------------
# Head MLP kernel: Linear(H, V) -> ReLU -> Linear(V, V), row-tiled over N = B*T.
# ----------------------------------------------------------------------------
def _mlp_head_kernel(x_ref, w1_ref, b1_ref, w2_ref, b2_ref, o_ref):
    h = jnp.dot(x_ref[...].astype(MATMUL_DTYPE), w1_ref[...].astype(MATMUL_DTYPE),
                preferred_element_type=jnp.float32) + b1_ref[...]
    h = jnp.maximum(h, 0.0)
    o_ref[...] = (jnp.dot(h.astype(MATMUL_DTYPE), w2_ref[...].astype(MATMUL_DTYPE),
                          preferred_element_type=jnp.float32) + b2_ref[...]
                  ).astype(o_ref.dtype)


def mlp_head(x_2d, w1, b1, w2, b2):
    """x_2d: (N, H); w1: (H, V), b1: (1, V), w2: (V, V), b2: (1, V)."""
    N, Hd = x_2d.shape
    V = w1.shape[1]
    tn = _row_tile(N)
    # TODO(synk): for production-size vocab on v7x (64 MiB VMEM) also tile the V
    #             dimension of w1/w2 and set vmem_limit_bytes with headroom.
    return pl.pallas_call(
        _mlp_head_kernel,
        grid=(N // tn,),
        in_specs=[
            pl.BlockSpec((tn, Hd), lambda i: (i, 0)),
            pl.BlockSpec((Hd, V), lambda i: (0, 0)),
            pl.BlockSpec((1, V), lambda i: (0, 0)),
            pl.BlockSpec((V, V), lambda i: (0, 0)),
            pl.BlockSpec((1, V), lambda i: (0, 0)),
        ],
        out_specs=pl.BlockSpec((tn, V), lambda i: (i, 0)),
        out_shape=jax.ShapeDtypeStruct((N, V), jnp.float32),
        compiler_params=pltpu.CompilerParams(dimension_semantics=("parallel",)),
    )(x_2d, w1, b1, w2, b2)


# ----------------------------------------------------------------------------
# Parameters (match PyTorch BaseModel init semantics).
# ----------------------------------------------------------------------------
def make_params(vocab_size, input_size, hidden_size, num_layers, key):
    keys = jax.random.split(key, 4 + num_layers)
    params = {}
    # nn.Embedding default init: N(0, 1)
    params["emb"] = jax.random.normal(keys[0], (vocab_size, input_size), jnp.float32)

    # nn.LSTM default init: U(-1/sqrt(H), 1/sqrt(H)) for all weights/biases.
    stdv = 1.0 / jnp.sqrt(hidden_size)
    lstm = []
    for l in range(num_layers):
        d_in = input_size if l == 0 else hidden_size
        kk = jax.random.split(keys[1 + l], 4)
        wih = jax.random.uniform(kk[0], (d_in, 4 * hidden_size), jnp.float32, -stdv, stdv)
        whh = jax.random.uniform(kk[1], (hidden_size, 4 * hidden_size), jnp.float32, -stdv, stdv)
        bih = jax.random.uniform(kk[2], (4 * hidden_size,), jnp.float32, -stdv, stdv)
        bhh = jax.random.uniform(kk[3], (4 * hidden_size,), jnp.float32, -stdv, stdv)
        lstm.append((wih, whh, (bih + bhh).reshape(1, 4 * hidden_size)))
    params["lstm"] = lstm

    # weights_init_normal: Linear weight ~ N(0, in_features^{-0.5}), bias = 0
    params["w1"] = (hidden_size ** -0.5) * jax.random.normal(
        keys[1 + num_layers], (hidden_size, vocab_size), jnp.float32)
    params["b1"] = jnp.zeros((1, vocab_size), jnp.float32)
    params["w2"] = (vocab_size ** -0.5) * jax.random.normal(
        keys[2 + num_layers], (vocab_size, vocab_size), jnp.float32)
    params["b2"] = jnp.zeros((1, vocab_size), jnp.float32)
    return params


# ----------------------------------------------------------------------------
# BaseModel forward
# ----------------------------------------------------------------------------
def base_model_forward(params, words_indices):
    """words_indices: (B, T) int32.  Returns (output, (h_n, c_n)).

    output: (B, T, vocab), or (T, vocab) when B == 1 (PyTorch output.squeeze(0)).
    h_n, c_n: (num_layers, B, hidden).
    """
    B, T = words_indices.shape
    # Embedding lookup (glue, plain JAX gather).
    embedded = params["emb"][words_indices]          # (B, T, D)
    x = jnp.transpose(embedded, (1, 0, 2))           # (T, B, D) time-major

    Tc = _pick_time_chunk(T)
    # TODO(synk): inter-layer dropout (p=0.1) of nn.LSTM omitted — inference semantics.
    # TODO(synk): layers run as separate pallas_calls; a fully fused variant would keep
    #             the (T,B,H) activations in VMEM between layers (saves one HBM round trip).
    h_list, c_list = [], []
    for (wih, whh, b) in params["lstm"]:
        d_in = wih.shape[0]
        H = whh.shape[0]
        # Hoisted input projection + bias: one batched MXU matmul over the whole sequence.
        gx = matmul_bias(x.reshape(T * B, d_in), wih, b).reshape(T, B, 4 * H)
        x, hN, cN = lstm_layer(gx, whh, Tc=Tc)       # x becomes (T, B, H)
        h_list.append(hN)
        c_list.append(cN)

    h_n = jnp.stack(h_list, axis=0)                  # (num_layers, B, H)
    c_n = jnp.stack(c_list, axis=0)

    H = x.shape[-1]
    out_bt = jnp.transpose(x, (1, 0, 2))             # (B, T, H) batch-first
    logits = mlp_head(out_bt.reshape(B * T, H),
                      params["w1"], params["b1"], params["w2"], params["b2"])
    V = logits.shape[-1]
    output = logits.reshape(B, T, V)
    if B == 1:                                       # PyTorch output.squeeze(0)
        output = output[0]
    return output, (h_n, c_n)


# ----------------------------------------------------------------------------
# Pure-JAX reference (for a correctness check of the Pallas path).
# ----------------------------------------------------------------------------
def _reference_forward(params, words_indices):
    B, T = words_indices.shape
    emb = params["emb"][words_indices]
    x = jnp.transpose(emb, (1, 0, 2))
    h_list, c_list = [], []
    for (wih, whh, b) in params["lstm"]:
        H = whh.shape[0]

        def step(carry, x_t, wih=wih, whh=whh, b=b, H=H):
            h, c = carry
            g = x_t @ wih + h @ whh + b
            i = jax.nn.sigmoid(g[:, 0 * H:1 * H])
            f = jax.nn.sigmoid(g[:, 1 * H:2 * H])
            gg = jnp.tanh(g[:, 2 * H:3 * H])
            o = jax.nn.sigmoid(g[:, 3 * H:4 * H])
            c = f * c + i * gg
            h = o * jnp.tanh(c)
            return (h, c), h

        init = (jnp.zeros((B, H), jnp.float32), jnp.zeros((B, H), jnp.float32))
        (hN, cN), y = lax.scan(step, init, x)
        h_list.append(hN)
        c_list.append(cN)
        x = y
    out = jnp.transpose(x, (1, 0, 2)).reshape(B * T, -1)
    out = jnp.maximum(out @ params["w1"] + params["b1"], 0.0) @ params["w2"] + params["b2"]
    V = out.shape[-1]
    out = out.reshape(B, T, V)
    if B == 1:
        out = out[0]
    return out, (jnp.stack(h_list, 0), jnp.stack(c_list, 0))


if __name__ == "__main__":
    vocab_size = 64
    input_size = 16
    hidden_size = 32
    num_layers = 2
    B, T = 2, 8

    key = jax.random.PRNGKey(0)
    k_params, k_idx = jax.random.split(key)
    params = make_params(vocab_size, input_size, hidden_size, num_layers, k_params)
    words_indices = jax.random.randint(k_idx, (B, T), 0, vocab_size, dtype=jnp.int32)

    output, (h_n, c_n) = jax.jit(base_model_forward)(params, words_indices)
    jax.block_until_ready((output, h_n, c_n))

    assert output.shape == (B, T, vocab_size)
    assert h_n.shape == (num_layers, B, hidden_size)
    assert c_n.shape == (num_layers, B, hidden_size)

    ref_out, (ref_h, ref_c) = _reference_forward(params, words_indices)
    assert jnp.allclose(output, ref_out, atol=1e-3, rtol=1e-3)
    assert jnp.allclose(h_n, ref_h, atol=1e-3, rtol=1e-3)
    assert jnp.allclose(c_n, ref_c, atol=1e-3, rtol=1e-3)

    print("KERNEL_OK")
</pallas_src>

<mosaic_0001>
module attributes {stable_mosaic.version = 11 : i64} {
  func.func @_matmul_bias_kernel(%arg0: i32, %arg1: memref<16x32xf32, #tpu.memory_space<vmem>>, %arg2: memref<32x128xf32, #tpu.memory_space<vmem>>, %arg3: memref<1x128xf32, #tpu.memory_space<vmem>>, %arg4: memref<16x128xf32, #tpu.memory_space<vmem>>) attributes {dimension_semantics = [#tpu.dimension_semantics<parallel>], iteration_bounds = array<i64: 1>, scalar_prefetch = 0 : i64, scratch_operands = 0 : i64, tpu.core_type = #tpu.core_type<tc>, window_params = [{transform_indices = @transform_0, window_bounds = array<i64: 16, 32>}, {pipeline_mode = #tpu.pipeline_mode<synchronous>, transform_indices = @transform_1, window_bounds = array<i64: 32, 128>}, {pipeline_mode = #tpu.pipeline_mode<synchronous>, transform_indices = @transform_2, window_bounds = array<i64: 1, 128>}, {transform_indices = @transform_3, window_bounds = array<i64: 16, 128>}]} {
    %c0 = arith.constant 0 : index
    %c0_0 = arith.constant 0 : index
    %0 = vector.load %arg1[%c0, %c0_0] : memref<16x32xf32, #tpu.memory_space<vmem>>, vector<16x32xf32>
    %c0_1 = arith.constant 0 : index
    %c0_2 = arith.constant 0 : index
    %1 = vector.load %arg2[%c0_1, %c0_2] : memref<32x128xf32, #tpu.memory_space<vmem>>, vector<32x128xf32>
    %cst = arith.constant dense<0.000000e+00> : vector<16x128xf32>
    %2 = tpu.matmul %0, %1, %cst {dimension_numbers = #tpu.dot_dimension_numbers<[1], [0], [0], [1], [0, 0, 1, 1], [], []>} : vector<16x32xf32>, vector<32x128xf32>, vector<16x128xf32> -> vector<16x128xf32>
    %c0_3 = arith.constant 0 : index
    %c0_4 = arith.constant 0 : index
    %3 = vector.load %arg3[%c0_3, %c0_4] : memref<1x128xf32, #tpu.memory_space<vmem>>, vector<1x128xf32>
    %4 = vector.broadcast %3 : vector<1x128xf32> to vector<16x128xf32>
    %5 = arith.addf %2, %4 : vector<16x128xf32>
    %c0_5 = arith.constant 0 : index
    %c0_6 = arith.constant 0 : index
    %6 = vector.load %arg4[%c0_5, %c0_6] : memref<16x128xf32, #tpu.memory_space<vmem>>, vector<16x128xf32>
    tpu.vector_store %arg4[%c0_5, %c0_6], %5 {strides = array<i32>} : memref<16x128xf32, #tpu.memory_space<vmem>>, vector<16x128xf32>,
    return
  }
  func.func @transform_0(%arg0: i32) -> (i32, i32) {
    %c0_i32 = arith.constant 0 : i32
    %c0_i32_0 = arith.constant 0 : i32
    return %arg0, %c0_i32 : i32, i32
  }
  func.func @transform_1(%arg0: i32) -> (i32, i32) {
    %c0_i32 = arith.constant 0 : i32
    %c0_i32_0 = arith.constant 0 : i32
    %c0_i32_1 = arith.constant 0 : i32
    return %c0_i32, %c0_i32_0 : i32, i32
  }
  func.func @transform_2(%arg0: i32) -> (i32, i32) {
    %c0_i32 = arith.constant 0 : i32
    %c0_i32_0 = arith.constant 0 : i32
    %c0_i32_1 = arith.constant 0 : i32
    return %c0_i32, %c0_i32_0 : i32, i32
  }
  func.func @transform_3(%arg0: i32) -> (i32, i32) {
    %c0_i32 = arith.constant 0 : i32
    %c0_i32_0 = arith.constant 0 : i32
    return %arg0, %c0_i32 : i32, i32
  }
}

module attributes {stable_mosaic.version = 11 : i64} {
  func.func @_matmul_bias_kernel(%arg0: i32, %arg1: memref<16x16xf32, #tpu.memory_space<vmem>>, %arg2: memref<16x128xf32, #tpu.memory_space<vmem>>, %arg3: memref<1x128xf32, #tpu.memory_space<vmem>>, %arg4: memref<16x128xf32, #tpu.memory_space<vmem>>) attributes {dimension_semantics = [#tpu.dimension_semantics<parallel>], iteration_bounds = array<i64: 1>, scalar_prefetch = 0 : i64, scratch_operands = 0 : i64, tpu.core_type = #tpu.core_type<tc>, window_params = [{transform_indices = @transform_0, window_bounds = array<i64: 16, 16>}, {pipeline_mode = #tpu.pipeline_mode<synchronous>, transform_indices = @transform_1, window_bounds = array<i64: 16, 128>}, {pipeline_mode = #tpu.pipeline_mode<synchronous>, transform_indices = @transform_2, window_bounds = array<i64: 1, 128>}, {transform_indices = @transform_3, window_bounds = array<i64: 16, 128>}]} {
    %c0 = arith.constant 0 : index
    %c0_0 = arith.constant 0 : index
    %0 = vector.load %arg1[%c0, %c0_0] : memref<16x16xf32, #tpu.memory_space<vmem>>, vector<16x16xf32>
    %c0_1 = arith.constant 0 : index
    %c0_2 = arith.constant 0 : index
    %1 = vector.load %arg2[%c0_1, %c0_2] : memref<16x128xf32, #tpu.memory_space<vmem>>, vector<16x128xf32>
    %cst = arith.constant dense<0.000000e+00> : vector<16x128xf32>
    %2 = tpu.matmul %0, %1, %cst {dimension_numbers = #tpu.dot_dimension_numbers<[1], [0], [0], [1], [0, 0, 1, 1], [], []>} : vector<16x16xf32>, vector<16x128xf32>, vector<16x128xf32> -> vector<16x128xf32>
    %c0_3 = arith.constant 0 : index
    %c0_4 = arith.constant 0 : index
    %3 = vector.load %arg3[%c0_3, %c0_4] : memref<1x128xf32, #tpu.memory_space<vmem>>, vector<1x128xf32>
    %4 = vector.broadcast %3 : vector<1x128xf32> to vector<16x128xf32>
    %5 = arith.addf %2, %4 : vector<16x128xf32>
    %c0_5 = arith.constant 0 : index
    %c0_6 = arith.constant 0 : index
    %6 = vector.load %arg4[%c0_5, %c0_6] : memref<16x128xf32, #tpu.memory_space<vmem>>, vector<16x128xf32>
    tpu.vector_store %arg4[%c0_5, %c0_6], %5 {strides = array<i32>} : memref<16x128xf32, #tpu.memory_space<vmem>>, vector<16x128xf32>,
    return
  }
  func.func @transform_0(%arg0: i32) -> (i32, i32) {
    %c0_i32 = arith.constant 0 : i32
    %c0_i32_0 = arith.constant 0 : i32
    return %arg0, %c0_i32 : i32, i32
  }
  func.func @transform_1(%arg0: i32) -> (i32, i32) {
    %c0_i32 = arith.constant 0 : i32
    %c0_i32_0 = arith.constant 0 : i32
    %c0_i32_1 = arith.constant 0 : i32
    return %c0_i32, %c0_i32_0 : i32, i32
  }
  func.func @transform_2(%arg0: i32) -> (i32, i32) {
    %c0_i32 = arith.constant 0 : i32
    %c0_i32_0 = arith.constant 0 : i32
    %c0_i32_1 = arith.constant 0 : i32
    return %c0_i32, %c0_i32_0 : i32, i32
  }
  func.func @transform_3(%arg0: i32) -> (i32, i32) {
    %c0_i32 = arith.constant 0 : i32
    %c0_i32_0 = arith.constant 0 : i32
    return %arg0, %c0_i32 : i32, i32
  }
}

module attributes {stable_mosaic.version = 11 : i64} {
  func.func @_mlp_head_kernel(%arg0: i32, %arg1: memref<16x32xf32, #tpu.memory_space<vmem>>, %arg2: memref<32x64xf32, #tpu.memory_space<vmem>>, %arg3: memref<1x64xf32, #tpu.memory_space<vmem>>, %arg4: memref<64x64xf32, #tpu.memory_space<vmem>>, %arg5: memref<1x64xf32, #tpu.memory_space<vmem>>, %arg6: memref<16x64xf32, #tpu.memory_space<vmem>>) attributes {dimension_semantics = [#tpu.dimension_semantics<parallel>], iteration_bounds = array<i64: 1>, scalar_prefetch = 0 : i64, scratch_operands = 0 : i64, tpu.core_type = #tpu.core_type<tc>, window_params = [{transform_indices = @transform_0, window_bounds = array<i64: 16, 32>}, {pipeline_mode = #tpu.pipeline_mode<synchronous>, transform_indices = @transform_1, window_bounds = array<i64: 32, 64>}, {pipeline_mode = #tpu.pipeline_mode<synchronous>, transform_indices = @transform_2, window_bounds = array<i64: 1, 64>}, {pipeline_mode = #tpu.pipeline_mode<synchronous>, transform_indices = @transform_3, window_bounds = array<i64: 64, 64>}, {pipeline_mode = #tpu.pipeline_mode<synchronous>, transform_indices = @transform_4, window_bounds = array<i64: 1, 64>}, {transform_indices = @transform_5, window_bounds = array<i64: 16, 64>}]} {
    %c0 = arith.constant 0 : index
    %c0_0 = arith.constant 0 : index
    %0 = vector.load %arg1[%c0, %c0_0] : memref<16x32xf32, #tpu.memory_space<vmem>>, vector<16x32xf32>
    %c0_1 = arith.constant 0 : index
    %c0_2 = arith.constant 0 : index
    %1 = vector.load %arg2[%c0_1, %c0_2] : memref<32x64xf32, #tpu.memory_space<vmem>>, vector<32x64xf32>
    %cst = arith.constant dense<0.000000e+00> : vector<16x64xf32>
    %2 = tpu.matmul %0, %1, %cst {dimension_numbers = #tpu.dot_dimension_numbers<[1], [0], [0], [1], [0, 0, 1, 1], [], []>} : vector<16x32xf32>, vector<32x64xf32>, vector<16x64xf32> -> vector<16x64xf32>
    %c0_3 = arith.constant 0 : index
    %c0_4 = arith.constant 0 : index
    %3 = vector.load %arg3[%c0_3, %c0_4] : memref<1x64xf32, #tpu.memory_space<vmem>>, vector<1x64xf32>
    %4 = vector.broadcast %3 : vector<1x64xf32> to vector<16x64xf32>
    %5 = arith.addf %2, %4 : vector<16x64xf32>
    %cst_5 = arith.constant 0.000000e+00 : f32
    %6 = vector.broadcast %cst_5 : f32 to vector<16x64xf32>
    %7 = arith.maximumf %5, %6 : vector<16x64xf32>
    %c0_6 = arith.constant 0 : index
    %c0_7 = arith.constant 0 : index
    %8 = vector.load %arg4[%c0_6, %c0_7] : memref<64x64xf32, #tpu.memory_space<vmem>>, vector<64x64xf32>
    %cst_8 = arith.constant dense<0.000000e+00> : vector<16x64xf32>
    %9 = tpu.matmul %7, %8, %cst_8 {dimension_numbers = #tpu.dot_dimension_numbers<[1], [0], [0], [1], [0, 0, 1, 1], [], []>} : vector<16x64xf32>, vector<64x64xf32>, vector<16x64xf32> -> vector<16x64xf32>
    %c0_9 = arith.constant 0 : index
    %c0_10 = arith.constant 0 : index
    %10 = vector.load %arg5[%c0_9, %c0_10] : memref<1x64xf32, #tpu.memory_space<vmem>>, vector<1x64xf32>
    %11 = vector.broadcast %10 : vector<1x64xf32> to vector<16x64xf32>
    %12 = arith.addf %9, %11 : vector<16x64xf32>
    %c0_11 = arith.constant 0 : index
    %c0_12 = arith.constant 0 : index
    %13 = vector.load %arg6[%c0_11, %c0_12] : memref<16x64xf32, #tpu.memory_space<vmem>>, vector<16x64xf32>
    tpu.vector_store %arg6[%c0_11, %c0_12], %12 {strides = array<i32>} : memref<16x64xf32, #tpu.memory_space<vmem>>, vector<16x64xf32>,
    return
  }
  func.func @transform_0(%arg0: i32) -> (i32, i32) {
    %c0_i32 = arith.constant 0 : i32
    %c0_i32_0 = arith.constant 0 : i32
    return %arg0, %c0_i32 : i32, i32
  }
  func.func @transform_1(%arg0: i32) -> (i32, i32) {
    %c0_i32 = arith.constant 0 : i32
    %c0_i32_0 = arith.constant 0 : i32
    %c0_i32_1 = arith.constant 0 : i32
    return %c0_i32, %c0_i32_0 : i32, i32
  }
  func.func @transform_2(%arg0: i32) -> (i32, i32) {
    %c0_i32 = arith.constant 0 : i32
    %c0_i32_0 = arith.constant 0 : i32
    %c0_i32_1 = arith.constant 0 : i32
    return %c0_i32, %c0_i32_0 : i32, i32
  }
  func.func @transform_3(%arg0: i32) -> (i32, i32) {
    %c0_i32 = arith.constant 0 : i32
    %c0_i32_0 = arith.constant 0 : i32
    %c0_i32_1 = arith.constant 0 : i32
    return %c0_i32, %c0_i32_0 : i32, i32
  }
  func.func @transform_4(%arg0: i32) -> (i32, i32) {
    %c0_i32 = arith.constant 0 : i32
    %c0_i32_0 = arith.constant 0 : i32
    %c0_i32_1 = arith.constant 0 : i32
    return %c0_i32, %c0_i32_0 : i32, i32
  }
  func.func @transform_5(%arg0: i32) -> (i32, i32) {
    %c0_i32 = arith.constant 0 : i32
    %c0_i32_0 = arith.constant 0 : i32
    return %arg0, %c0_i32 : i32, i32
  }
}

module attributes {stable_mosaic.version = 11 : i64} {
  func.func @_lstm_recurrence_kernel(%arg0: i32, %arg1: memref<8x2x128xf32, #tpu.memory_space<vmem>>, %arg2: memref<32x128xf32, #tpu.memory_space<vmem>>, %arg3: memref<8x2x32xf32, #tpu.memory_space<vmem>>, %arg4: memref<2x32xf32, #tpu.memory_space<vmem>>, %arg5: memref<2x32xf32, #tpu.memory_space<vmem>>, %arg6: memref<2x32xf32, #tpu.memory_space<vmem>>, %arg7: memref<2x32xf32, #tpu.memory_space<vmem>>, %arg8: memref<8x2x32xf32, #tpu.memory_space<vmem>>) attributes {dimension_semantics = [#tpu.dimension_semantics<arbitrary>], iteration_bounds = array<i64: 1>, scalar_prefetch = 0 : i64, scratch_operands = 3 : i64, tpu.core_type = #tpu.core_type<tc>, window_params = [{transform_indices = @transform_0, window_bounds = array<i64: 8, 2, 128>}, {pipeline_mode = #tpu.pipeline_mode<synchronous>, transform_indices = @transform_1, window_bounds = array<i64: 32, 128>}, {transform_indices = @transform_2, window_bounds = array<i64: 8, 2, 32>}, {pipeline_mode = #tpu.pipeline_mode<synchronous>, transform_indices = @transform_3, window_bounds = array<i64: 2, 32>}, {pipeline_mode = #tpu.pipeline_mode<synchronous>, transform_indices = @transform_4, window_bounds = array<i64: 2, 32>}]} {
    %c0_i32 = arith.constant 0 : i32
    %0 = arith.cmpi eq, %arg0, %c0_i32 : i32
    %1 = arith.extui %0 : i1 to i32
    %c0_i32_0 = arith.constant 0 : i32
    %2 = arith.cmpi ne, %1, %c0_i32_0 : i32
    scf.if %2 {
      %cst_138 = arith.constant 0.000000e+00 : f32
      %313 = vector.broadcast %cst_138 : f32 to vector<2x32xf32>
      %c0_139 = arith.constant 0 : index
      %c0_140 = arith.constant 0 : index
      %314 = vector.load %arg6[%c0_139, %c0_140] : memref<2x32xf32, #tpu.memory_space<vmem>>, vector<2x32xf32>
      tpu.vector_store %arg6[%c0_139, %c0_140], %313 {strides = array<i32>} : memref<2x32xf32, #tpu.memory_space<vmem>>, vector<2x32xf32>,
      %cst_141 = arith.constant 0.000000e+00 : f32
      %315 = vector.broadcast %cst_141 : f32 to vector<2x32xf32>
      %c0_142 = arith.constant 0 : index
      %c0_143 = arith.constant 0 : index
      %316 = vector.load %arg7[%c0_142, %c0_143] : memref<2x32xf32, #tpu.memory_space<vmem>>, vector<2x32xf32>
      tpu.vector_store %arg7[%c0_142, %c0_143], %315 {strides = array<i32>} : memref<2x32xf32, #tpu.memory_space<vmem>>, vector<2x32xf32>,
    } else {
    }
    %c0 = arith.constant 0 : index
    %c0_1 = arith.constant 0 : index
    %3 = vector.load %arg2[%c0, %c0_1] : memref<32x128xf32, #tpu.memory_space<vmem>>, vector<32x128xf32>
    %c0_i32_2 = arith.constant 0 : i32
    %c0_3 = arith.constant 0 : index
    %c0_4 = arith.constant 0 : index
    %4 = vector.load %arg6[%c0_3, %c0_4] : memref<2x32xf32, #tpu.memory_space<vmem>>, vector<2x32xf32>
    %c0_5 = arith.constant 0 : index
    %c0_6 = arith.constant 0 : index
    %5 = vector.load %arg7[%c0_5, %c0_6] : memref<2x32xf32, #tpu.memory_space<vmem>>, vector<2x32xf32>
    %6 = arith.index_cast %c0_i32_2 : i32 to index
    %c0_7 = arith.constant 0 : index
    %c0_8 = arith.constant 0 : index
    %7 = vector.load %arg1[%6, %c0_7, %c0_8] : memref<8x2x128xf32, #tpu.memory_space<vmem>>, vector<1x2x128xf32>
    %8 = vector.shape_cast %7 : vector<1x2x128xf32> to vector<2x128xf32>
    %cst = arith.constant dense<0.000000e+00> : vector<2x128xf32>
    %9 = tpu.matmul %4, %3, %cst {dimension_numbers = #tpu.dot_dimension_numbers<[1], [0], [0], [1], [0, 0, 1, 1], [], []>} : vector<2x32xf32>, vector<32x128xf32>, vector<2x128xf32> -> vector<2x128xf32>
    %10 = arith.addf %8, %9 : vector<2x128xf32>
    %11 = vector.extract_strided_slice %10 {offsets = [0, 0], sizes = [2, 32], strides = [1, 1]} : vector<2x128xf32> to vector<2x32xf32>
    %12 = arith.negf %11 : vector<2x32xf32>
    %13 = math.exp %12 : vector<2x32xf32>
    %cst_9 = arith.constant 1.000000e+00 : f32
    %14 = vector.broadcast %cst_9 : f32 to vector<2x32xf32>
    %15 = arith.addf %14, %13 : vector<2x32xf32>
    %16 = arith.divf %14, %15 : vector<2x32xf32>
    %17 = vector.extract_strided_slice %10 {offsets = [0, 32], sizes = [2, 32], strides = [1, 1]} : vector<2x128xf32> to vector<2x32xf32>
    %18 = arith.negf %17 : vector<2x32xf32>
    %19 = math.exp %18 : vector<2x32xf32>
    %cst_10 = arith.constant 1.000000e+00 : f32
    %20 = vector.broadcast %cst_10 : f32 to vector<2x32xf32>
    %21 = arith.addf %20, %19 : vector<2x32xf32>
    %22 = arith.divf %20, %21 : vector<2x32xf32>
    %23 = vector.extract_strided_slice %10 {offsets = [0, 64], sizes = [2, 32], strides = [1, 1]} : vector<2x128xf32> to vector<2x32xf32>
    %24 = math.tanh %23 : vector<2x32xf32>
    %25 = vector.extract_strided_slice %10 {offsets = [0, 96], sizes = [2, 32], strides = [1, 1]} : vector<2x128xf32> to vector<2x32xf32>
    %26 = arith.negf %25 : vector<2x32xf32>
    %27 = math.exp %26 : vector<2x32xf32>
    %cst_11 = arith.constant 1.000000e+00 : f32
    %28 = vector.broadcast %cst_11 : f32 to vector<2x32xf32>
    %29 = arith.addf %28, %27 : vector<2x32xf32>
    %30 = arith.divf %28, %29 : vector<2x32xf32>
    %31 = arith.mulf %22, %5 : vector<2x32xf32>
    %32 = arith.mulf %16, %24 : vector<2x32xf32>
    %33 = arith.addf %31, %32 : vector<2x32xf32>
    %34 = math.tanh %33 : vector<2x32xf32>
    %35 = arith.mulf %30, %34 : vector<2x32xf32>
    %c0_12 = arith.constant 0 : index
    %c0_13 = arith.constant 0 : index
    %36 = vector.load %arg6[%c0_12, %c0_13] : memref<2x32xf32, #tpu.memory_space<vmem>>, vector<2x32xf32>
    tpu.vector_store %arg6[%c0_12, %c0_13], %35 {strides = array<i32>} : memref<2x32xf32, #tpu.memory_space<vmem>>, vector<2x32xf32>,
    %c0_14 = arith.constant 0 : index
    %c0_15 = arith.constant 0 : index
    %37 = vector.load %arg7[%c0_14, %c0_15] : memref<2x32xf32, #tpu.memory_space<vmem>>, vector<2x32xf32>
    tpu.vector_store %arg7[%c0_14, %c0_15], %33 {strides = array<i32>} : memref<2x32xf32, #tpu.memory_space<vmem>>, vector<2x32xf32>,
    %38 = arith.index_cast %c0_i32_2 : i32 to index
    %c0_16 = arith.constant 0 : index
    %c0_17 = arith.constant 0 : index
    %39 = vector.load %arg8[%38, %c0_16, %c0_17] : memref<8x2x32xf32, #tpu.memory_space<vmem>>, vector<1x2x32xf32>
    %40 = vector.shape_cast %39 : vector<1x2x32xf32> to vector<2x32xf32>
    %41 = vector.shape_cast %35 : vector<2x32xf32> to vector<1x2x32xf32>
    tpu.vector_store %arg8[%38, %c0_16, %c0_17], %41 {strides = array<i32>} : memref<8x2x32xf32, #tpu.memory_space<vmem>>, vector<1x2x32xf32>,
    %c1_i32 = arith.constant 1 : i32
    %c0_18 = arith.constant 0 : index
    %c0_19 = arith.constant 0 : index
    %42 = vector.load %arg6[%c0_18, %c0_19] : memref<2x32xf32, #tpu.memory_space<vmem>>, vector<2x32xf32>
    %c0_20 = arith.constant 0 : index
    %c0_21 = arith.constant 0 : index
    %43 = vector.load %arg7[%c0_20, %c0_21] : memref<2x32xf32, #tpu.memory_space<vmem>>, vector<2x32xf32>
    %44 = arith.index_cast %c1_i32 : i32 to index
    %c0_22 = arith.constant 0 : index
    %c0_23 = arith.constant 0 : index
    %45 = vector.load %arg1[%44, %c0_22, %c0_23] : memref<8x2x128xf32, #tpu.memory_space<vmem>>, vector<1x2x128xf32>
    %46 = vector.shape_cast %45 : vector<1x2x128xf32> to vector<2x128xf32>
    %cst_24 = arith.constant dense<0.000000e+00> : vector<2x128xf32>
    %47 = tpu.matmul %42, %3, %cst_24 {dimension_numbers = #tpu.dot_dimension_numbers<[1], [0], [0], [1], [0, 0, 1, 1], [], []>} : vector<2x32xf32>, vector<32x128xf32>, vector<2x128xf32> -> vector<2x128xf32>
    %48 = arith.addf %46, %47 : vector<2x128xf32>
    %49 = vector.extract_strided_slice %48 {offsets = [0, 0], sizes = [2, 32], strides = [1, 1]} : vector<2x128xf32> to vector<2x32xf32>
    %50 = arith.negf %49 : vector<2x32xf32>
    %51 = math.exp %50 : vector<2x32xf32>
    %cst_25 = arith.constant 1.000000e+00 : f32
    %52 = vector.broadcast %cst_25 : f32 to vector<2x32xf32>
    %53 = arith.addf %52, %51 : vector<2x32xf32>
    %54 = arith.divf %52, %53 : vector<2x32xf32>
    %55 = vector.extract_strided_slice %48 {offsets = [0, 32], sizes = [2, 32], strides = [1, 1]} : vector<2x128xf32> to vector<2x32xf32>
    %56 = arith.negf %55 : vector<2x32xf32>
    %57 = math.exp %56 : vector<2x32xf32>
    %cst_26 = arith.constant 1.000000e+00 : f32
    %58 = vector.broadcast %cst_26 : f32 to vector<2x32xf32>
    %59 = arith.addf %58, %57 : vector<2x32xf32>
    %60 = arith.divf %58, %59 : vector<2x32xf32>
    %61 = vector.extract_strided_slice %48 {offsets = [0, 64], sizes = [2, 32], strides = [1, 1]} : vector<2x128xf32> to vector<2x32xf32>
    %62 = math.tanh %61 : vector<2x32xf32>
    %63 = vector.extract_strided_slice %48 {offsets = [0, 96], sizes = [2, 32], strides = [1, 1]} : vector<2x128xf32> to vector<2x32xf32>
    %64 = arith.negf %63 : vector<2x32xf32>
    %65 = math.exp %64 : vector<2x32xf32>
    %cst_27 = arith.constant 1.000000e+00 : f32
    %66 = vector.broadcast %cst_27 : f32 to vector<2x32xf32>
    %67 = arith.addf %66, %65 : vector<2x32xf32>
    %68 = arith.divf %66, %67 : vector<2x32xf32>
    %69 = arith.mulf %60, %43 : vector<2x32xf32>
    %70 = arith.mulf %54, %62 : vector<2x32xf32>
    %71 = arith.addf %69, %70 : vector<2x32xf32>
    %72 = math.tanh %71 : vector<2x32xf32>
    %73 = arith.mulf %68, %72 : vector<2x32xf32>
    %c0_28 = arith.constant 0 : index
    %c0_29 = arith.constant 0 : index
    %74 = vector.load %arg6[%c0_28, %c0_29] : memref<2x32xf32, #tpu.memory_space<vmem>>, vector<2x32xf32>
    tpu.vector_store %arg6[%c0_28, %c0_29], %73 {strides = array<i32>} : memref<2x32xf32, #tpu.memory_space<vmem>>, vector<2x32xf32>,
    %c0_30 = arith.constant 0 : index
    %c0_31 = arith.constant 0 : index
    %75 = vector.load %arg7[%c0_30, %c0_31] : memref<2x32xf32, #tpu.memory_space<vmem>>, vector<2x32xf32>
    tpu.vector_store %arg7[%c0_30, %c0_31], %71 {strides = array<i32>} : memref<2x32xf32, #tpu.memory_space<vmem>>, vector<2x32xf32>,
    %76 = arith.index_cast %c1_i32 : i32 to index
    %c0_32 = arith.constant 0 : index
    %c0_33 = arith.constant 0 : index
    %77 = vector.load %arg8[%76, %c0_32, %c0_33] : memref<8x2x32xf32, #tpu.memory_space<vmem>>, vector<1x2x32xf32>
    %78 = vector.shape_cast %77 : vector<1x2x32xf32> to vector<2x32xf32>
    %79 = vector.shape_cast %73 : vector<2x32xf32> to vector<1x2x32xf32>
    tpu.vector_store %arg8[%76, %c0_32, %c0_33], %79 {strides = array<i32>} : memref<8x2x32xf32, #tpu.memory_space<vmem>>, vector<1x2x32xf32>,
    %c2_i32 = arith.constant 2 : i32
    %c0_34 = arith.constant 0 : index
    %c0_35 = arith.constant 0 : index
    %80 = vector.load %arg6[%c0_34, %c0_35] : memref<2x32xf32, #tpu.memory_space<vmem>>, vector<2x32xf32>
    %c0_36 = arith.constant 0 : index
    %c0_37 = arith.constant 0 : index
    %81 = vector.load %arg7[%c0_36, %c0_37] : memref<2x32xf32, #tpu.memory_space<vmem>>, vector<2x32xf32>
    %82 = arith.index_cast %c2_i32 : i32 to index
    %c0_38 = arith.constant 0 : index
    %c0_39 = arith.constant 0 : index
    %83 = vector.load %arg1[%82, %c0_38, %c0_39] : memref<8x2x128xf32, #tpu.memory_space<vmem>>, vector<1x2x128xf32>
    %84 = vector.shape_cast %83 : vector<1x2x128xf32> to vector<2x128xf32>
    %cst_40 = arith.constant dense<0.000000e+00> : vector<2x128xf32>
    %85 = tpu.matmul %80, %3, %cst_40 {dimension_numbers = #tpu.dot_dimension_numbers<[1], [0], [0], [1], [0, 0, 1, 1], [], []>} : vector<2x32xf32>, vector<32x128xf32>, vector<2x128xf32> -> vector<2x128xf32>
    %86 = arith.addf %84, %85 : vector<2x128xf32>
    %87 = vector.extract_strided_slice %86 {offsets = [0, 0], sizes = [2, 32], strides = [1, 1]} : vector<2x128xf32> to vector<2x32xf32>
    %88 = arith.negf %87 : vector<2x32xf32>
    %89 = math.exp %88 : vector<2x32xf32>
    %cst_41 = arith.constant 1.000000e+00 : f32
    %90 = vector.broadcast %cst_41 : f32 to vector<2x32xf32>
    %91 = arith.addf %90, %89 : vector<2x32xf32>
    %92 = arith.divf %90, %91 : vector<2x32xf32>
    %93 = vector.extract_strided_slice %86 {offsets = [0, 32], sizes = [2, 32], strides = [1, 1]} : vector<2x128xf32> to vector<2x32xf32>
    %94 = arith.negf %93 : vector<2x32xf32>
    %95 = math.exp %94 : vector<2x32xf32>
    %cst_42 = arith.constant 1.000000e+00 : f32
    %96 = vector.broadcast %cst_42 : f32 to vector<2x32xf32>
    %97 = arith.addf %96, %95 : vector<2x32xf32>
    %98 = arith.divf %96, %97 : vector<2x32xf32>
    %99 = vector.extract_strided_slice %86 {offsets = [0, 64], sizes = [2, 32], strides = [1, 1]} : vector<2x128xf32> to vector<2x32xf32>
    %100 = math.tanh %99 : vector<2x32xf32>
    %101 = vector.extract_strided_slice %86 {offsets = [0, 96], sizes = [2, 32], strides = [1, 1]} : vector<2x128xf32> to vector<2x32xf32>
    %102 = arith.negf %101 : vector<2x32xf32>
    %103 = math.exp %102 : vector<2x32xf32>
    %cst_43 = arith.constant 1.000000e+00 : f32
    %104 = vector.broadcast %cst_43 : f32 to vector<2x32xf32>
    %105 = arith.addf %104, %103 : vector<2x32xf32>
    %106 = arith.divf %104, %105 : vector<2x32xf32>
    %107 = arith.mulf %98, %81 : vector<2x32xf32>
    %108 = arith.mulf %92, %100 : vector<2x32xf32>
    %109 = arith.addf %107, %108 : vector<2x32xf32>
    %110 = math.tanh %109 : vector<2x32xf32>
    %111 = arith.mulf %106, %110 : vector<2x32xf32>
    %c0_44 = arith.constant 0 : index
    %c0_45 = arith.constant 0 : index
    %112 = vector.load %arg6[%c0_44, %c0_45] : memref<2x32xf32, #tpu.memory_space<vmem>>, vector<2x32xf32>
    tpu.vector_store %arg6[%c0_44, %c0_45], %111 {strides = array<i32>} : memref<2x32xf32, #tpu.memory_space<vmem>>, vector<2x32xf32>,
    %c0_46 = arith.constant 0 : index
    %c0_47 = arith.constant 0 : index
    %113 = vector.load %arg7[%c0_46, %c0_47] : memref<2x32xf32, #tpu.memory_space<vmem>>, vector<2x32xf32>
    tpu.vector_store %arg7[%c0_46, %c0_47], %109 {strides = array<i32>} : memref<2x32xf32, #tpu.memory_space<vmem>>, vector<2x32xf32>,
    %114 = arith.index_cast %c2_i32 : i32 to index
    %c0_48 = arith.constant 0 : index
    %c0_49 = arith.constant 0 : index
    %115 = vector.load %arg8[%114, %c0_48, %c0_49] : memref<8x2x32xf32, #tpu.memory_space<vmem>>, vector<1x2x32xf32>
    %116 = vector.shape_cast %115 : vector<1x2x32xf32> to vector<2x32xf32>
    %117 = vector.shape_cast %111 : vector<2x32xf32> to vector<1x2x32xf32>
    tpu.vector_store %arg8[%114, %c0_48, %c0_49], %117 {strides = array<i32>} : memref<8x2x32xf32, #tpu.memory_space<vmem>>, vector<1x2x32xf32>,
    %c3_i32 = arith.constant 3 : i32
    %c0_50 = arith.constant 0 : index
    %c0_51 = arith.constant 0 : index
    %118 = vector.load %arg6[%c0_50, %c0_51] : memref<2x32xf32, #tpu.memory_space<vmem>>, vector<2x32xf32>
    %c0_52 = arith.constant 0 : index
    %c0_53 = arith.constant 0 : index
    %119 = vector.load %arg7[%c0_52, %c0_53] : memref<2x32xf32, #tpu.memory_space<vmem>>, vector<2x32xf32>
    %120 = arith.index_cast %c3_i32 : i32 to index
    %c0_54 = arith.constant 0 : index
    %c0_55 = arith.constant 0 : index
    %121 = vector.load %arg1[%120, %c0_54, %c0_55] : memref<8x2x128xf32, #tpu.memory_space<vmem>>, vector<1x2x128xf32>
    %122 = vector.shape_cast %121 : vector<1x2x128xf32> to vector<2x128xf32>
    %cst_56 = arith.constant dense<0.000000e+00> : vector<2x128xf32>
    %123 = tpu.matmul %118, %3, %cst_56 {dimension_numbers = #tpu.dot_dimension_numbers<[1], [0], [0], [1], [0, 0, 1, 1], [], []>} : vector<2x32xf32>, vector<32x128xf32>, vector<2x128xf32> -> vector<2x128xf32>
    %124 = arith.addf %122, %123 : vector<2x128xf32>
    %125 = vector.extract_strided_slice %124 {offsets = [0, 0], sizes = [2, 32], strides = [1, 1]} : vector<2x128xf32> to vector<2x32xf32>
    %126 = arith.negf %125 : vector<2x32xf32>
    %127 = math.exp %126 : vector<2x32xf32>
    %cst_57 = arith.constant 1.000000e+00 : f32
    %128 = vector.broadcast %cst_57 : f32 to vector<2x32xf32>
    %129 = arith.addf %128, %127 : vector<2x32xf32>
    %130 = arith.divf %128, %129 : vector<2x32xf32>
    %131 = vector.extract_strided_slice %124 {offsets = [0, 32], sizes = [2, 32], strides = [1, 1]} : vector<2x128xf32> to vector<2x32xf32>
    %132 = arith.negf %131 : vector<2x32xf32>
    %133 = math.exp %132 : vector<2x32xf32>
    %cst_58 = arith.constant 1.000000e+00 : f32
    %134 = vector.broadcast %cst_58 : f32 to vector<2x32xf32>
    %135 = arith.addf %134, %133 : vector<2x32xf32>
    %136 = arith.divf %134, %135 : vector<2x32xf32>
    %137 = vector.extract_strided_slice %124 {offsets = [0, 64], sizes = [2, 32], strides = [1, 1]} : vector<2x128xf32> to vector<2x32xf32>
    %138 = math.tanh %137 : vector<2x32xf32>
    %139 = vector.extract_strided_slice %124 {offsets = [0, 96], sizes = [2, 32], strides = [1, 1]} : vector<2x128xf32> to vector<2x32xf32>
    %140 = arith.negf %139 : vector<2x32xf32>
    %141 = math.exp %140 : vector<2x32xf32>
    %cst_59 = arith.constant 1.000000e+00 : f32
    %142 = vector.broadcast %cst_59 : f32 to vector<2x32xf32>
    %143 = arith.addf %142, %141 : vector<2x32xf32>
    %144 = arith.divf %142, %143 : vector<2x32xf32>
    %145 = arith.mulf %136, %119 : vector<2x32xf32>
    %146 = arith.mulf %130, %138 : vector<2x32xf32>
    %147 = arith.addf %145, %146 : vector<2x32xf32>
    %148 = math.tanh %147 : vector<2x32xf32>
    %149 = arith.mulf %144, %148 : vector<2x32xf32>
    %c0_60 = arith.constant 0 : index
    %c0_61 = arith.constant 0 : index
    %150 = vector.load %arg6[%c0_60, %c0_61] : memref<2x32xf32, #tpu.memory_space<vmem>>, vector<2x32xf32>
    tpu.vector_store %arg6[%c0_60, %c0_61], %149 {strides = array<i32>} : memref<2x32xf32, #tpu.memory_space<vmem>>, vector<2x32xf32>,
    %c0_62 = arith.constant 0 : index
    %c0_63 = arith.constant 0 : index
    %151 = vector.load %arg7[%c0_62, %c0_63] : memref<2x32xf32, #tpu.memory_space<vmem>>, vector<2x32xf32>
    tpu.vector_store %arg7[%c0_62, %c0_63], %147 {strides = array<i32>} : memref<2x32xf32, #tpu.memory_space<vmem>>, vector<2x32xf32>,
    %152 = arith.index_cast %c3_i32 : i32 to index
    %c0_64 = arith.constant 0 : index
    %c0_65 = arith.constant 0 : index
    %153 = vector.load %arg8[%152, %c0_64, %c0_65] : memref<8x2x32xf32, #tpu.memory_space<vmem>>, vector<1x2x32xf32>
    %154 = vector.shape_cast %153 : vector<1x2x32xf32> to vector<2x32xf32>
    %155 = vector.shape_cast %149 : vector<2x32xf32> to vector<1x2x32xf32>
    tpu.vector_store %arg8[%152, %c0_64, %c0_65], %155 {strides = array<i32>} : memref<8x2x32xf32, #tpu.memory_space<vmem>>, vector<1x2x32xf32>,
    %c4_i32 = arith.constant 4 : i32
    %c0_66 = arith.constant 0 : index
    %c0_67 = arith.constant 0 : index
    %156 = vector.load %arg6[%c0_66, %c0_67] : memref<2x32xf32, #tpu.memory_space<vmem>>, vector<2x32xf32>
    %c0_68 = arith.constant 0 : index
    %c0_69 = arith.constant 0 : index
    %157 = vector.load %arg7[%c0_68, %c0_69] : memref<2x32xf32, #tpu.memory_space<vmem>>, vector<2x32xf32>
    %158 = arith.index_cast %c4_i32 : i32 to index
    %c0_70 = arith.constant 0 : index
    %c0_71 = arith.constant 0 : index
    %159 = vector.load %arg1[%158, %c0_70, %c0_71] : memref<8x2x128xf32, #tpu.memory_space<vmem>>, vector<1x2x128xf32>
    %160 = vector.shape_cast %159 : vector<1x2x128xf32> to vector<2x128xf32>
    %cst_72 = arith.constant dense<0.000000e+00> : vector<2x128xf32>
    %161 = tpu.matmul %156, %3, %cst_72 {dimension_numbers = #tpu.dot_dimension_numbers<[1], [0], [0], [1], [0, 0, 1, 1], [], []>} : vector<2x32xf32>, vector<32x128xf32>, vector<2x128xf32> -> vector<2x128xf32>
    %162 = arith.addf %160, %161 : vector<2x128xf32>
    %163 = vector.extract_strided_slice %162 {offsets = [0, 0], sizes = [2, 32], strides = [1, 1]} : vector<2x128xf32> to vector<2x32xf32>
    %164 = arith.negf %163 : vector<2x32xf32>
    %165 = math.exp %164 : vector<2x32xf32>
    %cst_73 = arith.constant 1.000000e+00 : f32
    %166 = vector.broadcast %cst_73 : f32 to vector<2x32xf32>
    %167 = arith.addf %166, %165 : vector<2x32xf32>
    %168 = arith.divf %166, %167 : vector<2x32xf32>
    %169 = vector.extract_strided_slice %162 {offsets = [0, 32], sizes = [2, 32], strides = [1, 1]} : vector<2x128xf32> to vector<2x32xf32>
    %170 = arith.negf %169 : vector<2x32xf32>
    %171 = math.exp %170 : vector<2x32xf32>
    %cst_74 = arith.constant 1.000000e+00 : f32
    %172 = vector.broadcast %cst_74 : f32 to vector<2x32xf32>
    %173 = arith.addf %172, %171 : vector<2x32xf32>
    %174 = arith.divf %172, %173 : vector<2x32xf32>
    %175 = vector.extract_strided_slice %162 {offsets = [0, 64], sizes = [2, 32], strides = [1, 1]} : vector<2x128xf32> to vector<2x32xf32>
    %176 = math.tanh %175 : vector<2x32xf32>
    %177 = vector.extract_strided_slice %162 {offsets = [0, 96], sizes = [2, 32], strides = [1, 1]} : vector<2x128xf32> to vector<2x32xf32>
    %178 = arith.negf %177 : vector<2x32xf32>
    %179 = math.exp %178 : vector<2x32xf32>
    %cst_75 = arith.constant 1.000000e+00 : f32
    %180 = vector.broadcast %cst_75 : f32 to vector<2x32xf32>
    %181 = arith.addf %180, %179 : vector<2x32xf32>
    %182 = arith.divf %180, %181 : vector<2x32xf32>
    %183 = arith.mulf %174, %157 : vector<2x32xf32>
    %184 = arith.mulf %168, %176 : vector<2x32xf32>
    %185 = arith.addf %183, %184 : vector<2x32xf32>
    %186 = math.tanh %185 : vector<2x32xf32>
    %187 = arith.mulf %182, %186 : vector<2x32xf32>
    %c0_76 = arith.constant 0 : index
    %c0_77 = arith.constant 0 : index
    %188 = vector.load %arg6[%c0_76, %c0_77] : memref<2x32xf32, #tpu.memory_space<vmem>>, vector<2x32xf32>
    tpu.vector_store %arg6[%c0_76, %c0_77], %187 {strides = array<i32>} : memref<2x32xf32, #tpu.memory_space<vmem>>, vector<2x32xf32>,
    %c0_78 = arith.constant 0 : index
    %c0_79 = arith.constant 0 : index
    %189 = vector.load %arg7[%c0_78, %c0_79] : memref<2x32xf32, #tpu.memory_space<vmem>>, vector<2x32xf32>
    tpu.vector_store %arg7[%c0_78, %c0_79], %185 {strides = array<i32>} : memref<2x32xf32, #tpu.memory_space<vmem>>, vector<2x32xf32>,
    %190 = arith.index_cast %c4_i32 : i32 to index
    %c0_80 = arith.constant 0 : index
    %c0_81 = arith.constant 0 : index
    %191 = vector.load %arg8[%190, %c0_80, %c0_81] : memref<8x2x32xf32, #tpu.memory_space<vmem>>, vector<1x2x32xf32>
    %192 = vector.shape_cast %191 : vector<1x2x32xf32> to vector<2x32xf32>
    %193 = vector.shape_cast %187 : vector<2x32xf32> to vector<1x2x32xf32>
    tpu.vector_store %arg8[%190, %c0_80, %c0_81], %193 {strides = array<i32>} : memref<8x2x32xf32, #tpu.memory_space<vmem>>, vector<1x2x32xf32>,
    %c5_i32 = arith.constant 5 : i32
    %c0_82 = arith.constant 0 : index
    %c0_83 = arith.constant 0 : index
    %194 = vector.load %arg6[%c0_82, %c0_83] : memref<2x32xf32, #tpu.memory_space<vmem>>, vector<2x32xf32>
    %c0_84 = arith.constant 0 : index
    %c0_85 = arith.constant 0 : index
    %195 = vector.load %arg7[%c0_84, %c0_85] : memref<2x32xf32, #tpu.memory_space<vmem>>, vector<2x32xf32>
    %196 = arith.index_cast %c5_i32 : i32 to index
    %c0_86 = arith.constant 0 : index
    %c0_87 = arith.constant 0 : index
    %197 = vector.load %arg1[%196, %c0_86, %c0_87] : memref<8x2x128xf32, #tpu.memory_space<vmem>>, vector<1x2x128xf32>
    %198 = vector.shape_cast %197 : vector<1x2x128xf32> to vector<2x128xf32>
    %cst_88 = arith.constant dense<0.000000e+00> : vector<2x128xf32>
    %199 = tpu.matmul %194, %3, %cst_88 {dimension_numbers = #tpu.dot_dimension_numbers<[1], [0], [0], [1], [0, 0, 1, 1], [], []>} : vector<2x32xf32>, vector<32x128xf32>, vector<2x128xf32> -> vector<2x128xf32>
    %200 = arith.addf %198, %199 : vector<2x128xf32>
    %201 = vector.extract_strided_slice %200 {offsets = [0, 0], sizes = [2, 32], strides = [1, 1]} : vector<2x128xf32> to vector<2x32xf32>
    %202 = arith.negf %201 : vector<2x32xf32>
    %203 = math.exp %202 : vector<2x32xf32>
    %cst_89 = arith.constant 1.000000e+00 : f32
    %204 = vector.broadcast %cst_89 : f32 to vector<2x32xf32>
    %205 = arith.addf %204, %203 : vector<2x32xf32>
    %206 = arith.divf %204, %205 : vector<2x32xf32>
    %207 = vector.extract_strided_slice %200 {offsets = [0, 32], sizes = [2, 32], strides = [1, 1]} : vector<2x128xf32> to vector<2x32xf32>
    %208 = arith.negf %207 : vector<2x32xf32>
    %209 = math.exp %208 : vector<2x32xf32>
    %cst_90 = arith.constant 1.000000e+00 : f32
    %210 = vector.broadcast %cst_90 : f32 to vector<2x32xf32>
    %211 = arith.addf %210, %209 : vector<2x32xf32>
    %212 = arith.divf %210, %211 : vector<2x32xf32>
    %213 = vector.extract_strided_slice %200 {offsets = [0, 64], sizes = [2, 32], strides = [1, 1]} : vector<2x128xf32> to vector<2x32xf32>
    %214 = math.tanh %213 : vector<2x32xf32>
    %215 = vector.extract_strided_slice %200 {offsets = [0, 96], sizes = [2, 32], strides = [1, 1]} : vector<2x128xf32> to vector<2x32xf32>
    %216 = arith.negf %215 : vector<2x32xf32>
    %217 = math.exp %216 : vector<2x32xf32>
    %cst_91 = arith.constant 1.000000e+00 : f32
    %218 = vector.broadcast %cst_91 : f32 to vector<2x32xf32>
    %219 = arith.addf %218, %217 : vector<2x32xf32>
    %220 = arith.divf %218, %219 : vector<2x32xf32>
    %221 = arith.mulf %212, %195 : vector<2x32xf32>
    %222 = arith.mulf %206, %214 : vector<2x32xf32>
    %223 = arith.addf %221, %222 : vector<2x32xf32>
    %224 = math.tanh %223 : vector<2x32xf32>
    %225 = arith.mulf %220, %224 : vector<2x32xf32>
    %c0_92 = arith.constant 0 : index
    %c0_93 = arith.constant 0 : index
    %226 = vector.load %arg6[%c0_92, %c0_93] : memref<2x32xf32, #tpu.memory_space<vmem>>, vector<2x32xf32>
    tpu.vector_store %arg6[%c0_92, %c0_93], %225 {strides = array<i32>} : memref<2x32xf32, #tpu.memory_space<vmem>>, vector<2x32xf32>,
    %c0_94 = arith.constant 0 : index
    %c0_95 = arith.constant 0 : index
    %227 = vector.load %arg7[%c0_94, %c0_95] : memref<2x32xf32, #tpu.memory_space<vmem>>, vector<2x32xf32>
    tpu.vector_store %arg7[%c0_94, %c0_95], %223 {strides = array<i32>} : memref<2x32xf32, #tpu.memory_space<vmem>>, vector<2x32xf32>,
    %228 = arith.index_cast %c5_i32 : i32 to index
    %c0_96 = arith.constant 0 : index
    %c0_97 = arith.constant 0 : index
    %229 = vector.load %arg8[%228, %c0_96, %c0_97] : memref<8x2x32xf32, #tpu.memory_space<vmem>>, vector<1x2x32xf32>
    %230 = vector.shape_cast %229 : vector<1x2x32xf32> to vector<2x32xf32>
    %231 = vector.shape_cast %225 : vector<2x32xf32> to vector<1x2x32xf32>
    tpu.vector_store %arg8[%228, %c0_96, %c0_97], %231 {strides = array<i32>} : memref<8x2x32xf32, #tpu.memory_space<vmem>>, vector<1x2x32xf32>,
    %c6_i32 = arith.constant 6 : i32
    %c0_98 = arith.constant 0 : index
    %c0_99 = arith.constant 0 : index
    %232 = vector.load %arg6[%c0_98, %c0_99] : memref<2x32xf32, #tpu.memory_space<vmem>>, vector<2x32xf32>
    %c0_100 = arith.constant 0 : index
    %c0_101 = arith.constant 0 : index
    %233 = vector.load %arg7[%c0_100, %c0_101] : memref<2x32xf32, #tpu.memory_space<vmem>>, vector<2x32xf32>
    %234 = arith.index_cast %c6_i32 : i32 to index
    %c0_102 = arith.constant 0 : index
    %c0_103 = arith.constant 0 : index
    %235 = vector.load %arg1[%234, %c0_102, %c0_103] : memref<8x2x128xf32, #tpu.memory_space<vmem>>, vector<1x2x128xf32>
    %236 = vector.shape_cast %235 : vector<1x2x128xf32> to vector<2x128xf32>
    %cst_104 = arith.constant dense<0.000000e+00> : vector<2x128xf32>
    %237 = tpu.matmul %232, %3, %cst_104 {dimension_numbers = #tpu.dot_dimension_numbers<[1], [0], [0], [1], [0, 0, 1, 1], [], []>} : vector<2x32xf32>, vector<32x128xf32>, vector<2x128xf32> -> vector<2x128xf32>
    %238 = arith.addf %236, %237 : vector<2x128xf32>
    %239 = vector.extract_strided_slice %238 {offsets = [0, 0], sizes = [2, 32], strides = [1, 1]} : vector<2x128xf32> to vector<2x32xf32>
    %240 = arith.negf %239 : vector<2x32xf32>
    %241 = math.exp %240 : vector<2x32xf32>
    %cst_105 = arith.constant 1.000000e+00 : f32
    %242 = vector.broadcast %cst_105 : f32 to vector<2x32xf32>
    %243 = arith.addf %242, %241 : vector<2x32xf32>
    %244 = arith.divf %242, %243 : vector<2x32xf32>
    %245 = vector.extract_strided_slice %238 {offsets = [0, 32], sizes = [2, 32], strides = [1, 1]} : vector<2x128xf32> to vector<2x32xf32>
    %246 = arith.negf %245 : vector<2x32xf32>
    %247 = math.exp %246 : vector<2x32xf32>
    %cst_106 = arith.constant 1.000000e+00 : f32
    %248 = vector.broadcast %cst_106 : f32 to vector<2x32xf32>
    %249 = arith.addf %248, %247 : vector<2x32xf32>
    %250 = arith.divf %248, %249 : vector<2x32xf32>
    %251 = vector.extract_strided_slice %238 {offsets = [0, 64], sizes = [2, 32], strides = [1, 1]} : vector<2x128xf32> to vector<2x32xf32>
    %252 = math.tanh %251 : vector<2x32xf32>
    %253 = vector.extract_strided_slice %238 {offsets = [0, 96], sizes = [2, 32], strides = [1, 1]} : vector<2x128xf32> to vector<2x32xf32>
    %254 = arith.negf %253 : vector<2x32xf32>
    %255 = math.exp %254 : vector<2x32xf32>
    %cst_107 = arith.constant 1.000000e+00 : f32
    %256 = vector.broadcast %cst_107 : f32 to vector<2x32xf32>
    %257 = arith.addf %256, %255 : vector<2x32xf32>
    %258 = arith.divf %256, %257 : vector<2x32xf32>
    %259 = arith.mulf %250, %233 : vector<2x32xf32>
    %260 = arith.mulf %244, %252 : vector<2x32xf32>
    %261 = arith.addf %259, %260 : vector<2x32xf32>
    %262 = math.tanh %261 : vector<2x32xf32>
    %263 = arith.mulf %258, %262 : vector<2x32xf32>
    %c0_108 = arith.constant 0 : index
    %c0_109 = arith.constant 0 : index
    %264 = vector.load %arg6[%c0_108, %c0_109] : memref<2x32xf32, #tpu.memory_space<vmem>>, vector<2x32xf32>
    tpu.vector_store %arg6[%c0_108, %c0_109], %263 {strides = array<i32>} : memref<2x32xf32, #tpu.memory_space<vmem>>, vector<2x32xf32>,
    %c0_110 = arith.constant 0 : index
    %c0_111 = arith.constant 0 : index
    %265 = vector.load %arg7[%c0_110, %c0_111] : memref<2x32xf32, #tpu.memory_space<vmem>>, vector<2x32xf32>
    tpu.vector_store %arg7[%c0_110, %c0_111], %261 {strides = array<i32>} : memref<2x32xf32, #tpu.memory_space<vmem>>, vector<2x32xf32>,
    %266 = arith.index_cast %c6_i32 : i32 to index
    %c0_112 = arith.constant 0 : index
    %c0_113 = arith.constant 0 : index
    %267 = vector.load %arg8[%266, %c0_112, %c0_113] : memref<8x2x32xf32, #tpu.memory_space<vmem>>, vector<1x2x32xf32>
    %268 = vector.shape_cast %267 : vector<1x2x32xf32> to vector<2x32xf32>
    %269 = vector.shape_cast %263 : vector<2x32xf32> to vector<1x2x32xf32>
    tpu.vector_store %arg8[%266, %c0_112, %c0_113], %269 {strides = array<i32>} : memref<8x2x32xf32, #tpu.memory_space<vmem>>, vector<1x2x32xf32>,
    %c7_i32 = arith.constant 7 : i32
    %c0_114 = arith.constant 0 : index
    %c0_115 = arith.constant 0 : index
    %270 = vector.load %arg6[%c0_114, %c0_115] : memref<2x32xf32, #tpu.memory_space<vmem>>, vector<2x32xf32>
    %c0_116 = arith.constant 0 : index
    %c0_117 = arith.constant 0 : index
    %271 = vector.load %arg7[%c0_116, %c0_117] : memref<2x32xf32, #tpu.memory_space<vmem>>, vector<2x32xf32>
    %272 = arith.index_cast %c7_i32 : i32 to index
    %c0_118 = arith.constant 0 : index
    %c0_119 = arith.constant 0 : index
    %273 = vector.load %arg1[%272, %c0_118, %c0_119] : memref<8x2x128xf32, #tpu.memory_space<vmem>>, vector<1x2x128xf32>
    %274 = vector.shape_cast %273 : vector<1x2x128xf32> to vector<2x128xf32>
    %cst_120 = arith.constant dense<0.000000e+00> : vector<2x128xf32>
    %275 = tpu.matmul %270, %3, %cst_120 {dimension_numbers = #tpu.dot_dimension_numbers<[1], [0], [0], [1], [0, 0, 1, 1], [], []>} : vector<2x32xf32>, vector<32x128xf32>, vector<2x128xf32> -> vector<2x128xf32>
    %276 = arith.addf %274, %275 : vector<2x128xf32>
    %277 = vector.extract_strided_slice %276 {offsets = [0, 0], sizes = [2, 32], strides = [1, 1]} : vector<2x128xf32> to vector<2x32xf32>
    %278 = arith.negf %277 : vector<2x32xf32>
    %279 = math.exp %278 : vector<2x32xf32>
    %cst_121 = arith.constant 1.000000e+00 : f32
    %280 = vector.broadcast %cst_121 : f32 to vector<2x32xf32>
    %281 = arith.addf %280, %279 : vector<2x32xf32>
    %282 = arith.divf %280, %281 : vector<2x32xf32>
    %283 = vector.extract_strided_slice %276 {offsets = [0, 32], sizes = [2, 32], strides = [1, 1]} : vector<2x128xf32> to vector<2x32xf32>
    %284 = arith.negf %283 : vector<2x32xf32>
    %285 = math.exp %284 : vector<2x32xf32>
    %cst_122 = arith.constant 1.000000e+00 : f32
    %286 = vector.broadcast %cst_122 : f32 to vector<2x32xf32>
    %287 = arith.addf %286, %285 : vector<2x32xf32>
    %288 = arith.divf %286, %287 : vector<2x32xf32>
    %289 = vector.extract_strided_slice %276 {offsets = [0, 64], sizes = [2, 32], strides = [1, 1]} : vector<2x128xf32> to vector<2x32xf32>
    %290 = math.tanh %289 : vector<2x32xf32>
    %291 = vector.extract_strided_slice %276 {offsets = [0, 96], sizes = [2, 32], strides = [1, 1]} : vector<2x128xf32> to vector<2x32xf32>
    %292 = arith.negf %291 : vector<2x32xf32>
    %293 = math.exp %292 : vector<2x32xf32>
    %cst_123 = arith.constant 1.000000e+00 : f32
    %294 = vector.broadcast %cst_123 : f32 to vector<2x32xf32>
    %295 = arith.addf %294, %293 : vector<2x32xf32>
    %296 = arith.divf %294, %295 : vector<2x32xf32>
    %297 = arith.mulf %288, %271 : vector<2x32xf32>
    %298 = arith.mulf %282, %290 : vector<2x32xf32>
    %299 = arith.addf %297, %298 : vector<2x32xf32>
    %300 = math.tanh %299 : vector<2x32xf32>
    %301 = arith.mulf %296, %300 : vector<2x32xf32>
    %c0_124 = arith.constant 0 : index
    %c0_125 = arith.constant 0 : index
    %302 = vector.load %arg6[%c0_124, %c0_125] : memref<2x32xf32, #tpu.memory_space<vmem>>, vector<2x32xf32>
    tpu.vector_store %arg6[%c0_124, %c0_125], %301 {strides = array<i32>} : memref<2x32xf32, #tpu.memory_space<vmem>>, vector<2x32xf32>,
    %c0_126 = arith.constant 0 : index
    %c0_127 = arith.constant 0 : index
    %303 = vector.load %arg7[%c0_126, %c0_127] : memref<2x32xf32, #tpu.memory_space<vmem>>, vector<2x32xf32>
    tpu.vector_store %arg7[%c0_126, %c0_127], %299 {strides = array<i32>} : memref<2x32xf32, #tpu.memory_space<vmem>>, vector<2x32xf32>,
    %304 = arith.index_cast %c7_i32 : i32 to index
    %c0_128 = arith.constant 0 : index
    %c0_129 = arith.constant 0 : index
    %305 = vector.load %arg8[%304, %c0_128, %c0_129] : memref<8x2x32xf32, #tpu.memory_space<vmem>>, vector<1x2x32xf32>
    %306 = vector.shape_cast %305 : vector<1x2x32xf32> to vector<2x32xf32>
    %307 = vector.shape_cast %301 : vector<2x32xf32> to vector<1x2x32xf32>
    tpu.vector_store %arg8[%304, %c0_128, %c0_129], %307 {strides = array<i32>} : memref<8x2x32xf32, #tpu.memory_space<vmem>>, vector<1x2x32xf32>,
    %c8_i32 = arith.constant 8 : i32
    %c0_130 = arith.constant 0 : index
    %c0_131 = arith.constant 0 : index
    %c0_132 = arith.constant 0 : index
    %308 = vector.load %arg8[%c0_130, %c0_131, %c0_132] : memref<8x2x32xf32, #tpu.memory_space<vmem>>, vector<8x2x32xf32>
    %c0_133 = arith.constant 0 : index
    %c0_134 = arith.constant 0 : index
    %c0_135 = arith.constant 0 : index
    %309 = vector.load %arg3[%c0_133, %c0_134, %c0_135] : memref<8x2x32xf32, #tpu.memory_space<vmem>>, vector<8x2x32xf32>
    tpu.vector_store %arg3[%c0_133, %c0_134, %c0_135], %308 {strides = array<i32>} : memref<8x2x32xf32, #tpu.memory_space<vmem>>, vector<8x2x32xf32>,
    %c0_i32_136 = arith.constant 0 : i32
    %310 = arith.cmpi eq, %arg0, %c0_i32_136 : i32
    %311 = arith.extui %310 : i1 to i32
    %c0_i32_137 = arith.constant 0 : i32
    %312 = arith.cmpi ne, %311, %c0_i32_137 : i32
    scf.if %312 {
      %c0_138 = arith.constant 0 : index
      %c0_139 = arith.constant 0 : index
      %313 = vector.load %arg6[%c0_138, %c0_139] : memref<2x32xf32, #tpu.memory_space<vmem>>, vector<2x32xf32>
      %c0_140 = arith.constant 0 : index
      %c0_141 = arith.constant 0 : index
      %314 = vector.load %arg4[%c0_140, %c0_141] : memref<2x32xf32, #tpu.memory_space<vmem>>, vector<2x32xf32>
      tpu.vector_store %arg4[%c0_140, %c0_141], %313 {strides = array<i32>} : memref<2x32xf32, #tpu.memory_space<vmem>>, vector<2x32xf32>,
      %c0_142 = arith.constant 0 : index
      %c0_143 = arith.constant 0 : index
      %315 = vector.load %arg7[%c0_142, %c0_143] : memref<2x32xf32, #tpu.memory_space<vmem>>, vector<2x32xf32>
      %c0_144 = arith.constant 0 : index
      %c0_145 = arith.constant 0 : index
      %316 = vector.load %arg5[%c0_144, %c0_145] : memref<2x32xf32, #tpu.memory_space<vmem>>, vector<2x32xf32>
      tpu.vector_store %arg5[%c0_144, %c0_145], %315 {strides = array<i32>} : memref<2x32xf32, #tpu.memory_space<vmem>>, vector<2x32xf32>,
    } else {
    }
    return
  }
  func.func @transform_0(%arg0: i32) -> (i32, i32, i32) {
    %c0_i32 = arith.constant 0 : i32
    %c0_i32_0 = arith.constant 0 : i32
    %c0_i32_1 = arith.constant 0 : i32
    return %arg0, %c0_i32, %c0_i32_0 : i32, i32, i32
  }
  func.func @transform_1(%arg0: i32) -> (i32, i32) {
    %c0_i32 = arith.constant 0 : i32
    %c0_i32_0 = arith.constant 0 : i32
    %c0_i32_1 = arith.constant 0 : i32
    return %c0_i32, %c0_i32_0 : i32, i32
  }
  func.func @transform_2(%arg0: i32) -> (i32, i32, i32) {
    %c0_i32 = arith.constant 0 : i32
    %c0_i32_0 = arith.constant 0 : i32
    %c0_i32_1 = arith.constant 0 : i32
    return %arg0, %c0_i32, %c0_i32_0 : i32, i32, i32
  }
  func.func @transform_3(%arg0: i32) -> (i32, i32) {
    %c0_i32 = arith.constant 0 : i32
    %c0_i32_0 = arith.constant 0 : i32
    %c0_i32_1 = arith.constant 0 : i32
    return %c0_i32, %c0_i32_0 : i32, i32
  }
  func.func @transform_4(%arg0: i32) -> (i32, i32) {
    %c0_i32 = arith.constant 0 : i32
    %c0_i32_0 = arith.constant 0 : i32
    %c0_i32_1 = arith.constant 0 : i32
    return %c0_i32, %c0_i32_0 : i32, i32
  }
}

</mosaic_0001>

<llo_original>
// kernel: base_model_forward.5
$region0: #{base_model_forward.5}
  #allocation0 [shape = 'u32[]', space=smem, size = 0x4, offset = 0x4, fixed_abs, tag = 'smem constant byte address 0x4 - core index']
  #allocation1 [shape = 'u32[144,128]{1,0:T(1,128)}', space=vmem, size = 0x12000, scoped, tag = 'internal scratch']
  %s0 = inlined_call_operand.vmem [shape: f32[16,16], index: 0, kind: input, shape index: {}]
  %s1 = inlined_call_operand.vmem [shape: f32[16,128], index: 1, kind: input, shape index: {}]
  %s2 = inlined_call_operand.vmem [shape: f32[1,128], index: 2, kind: input, shape index: {}]
  %s3 = inlined_call_operand.vmem [shape: f32[16,128], index: 3, kind: output, shape index: {}]
  %s4 = sld [smem:[#allocation0]]
  $region22: #{base_model_forward.5} parent=0
    _
  %s6 = ssub.s32 1, %s4
  %s7 = scalar_select 0, %s6, %s4
  // Predicated region
  $region2: #{base_model_forward.5} parent=0 // pred_check
    _
  $region3: #{base_model_forward.5} parent=0 // pred_check_branch
    %9 = sbr.rel (0) target = $region5
  $region4: #{base_model_forward.5} parent=0 // pred_region
    _
  $region5: #{base_model_forward.5} parent=0 // pred_fallthru
    _
  // Predicated region
  $region6: #{base_model_forward.5} parent=0 // pred_check
    _
  $region7: #{base_model_forward.5} parent=0 // pred_check_branch
    %11 = sbr.rel (0) target = $region9
  $region8: #{base_model_forward.5} parent=0 // pred_region
    _
  $region9: #{base_model_forward.5} parent=0 // pred_fallthru
    _
  // Predicated region
  $region10: #{base_model_forward.5} parent=0 // pred_check
    _
  $region11: #{base_model_forward.5} parent=0 // pred_check_branch
    %13 = sbr.rel (0) target = $region13
  $region12: #{base_model_forward.5} parent=0 // pred_region
    _
  $region13: #{base_model_forward.5} parent=0 // pred_fallthru
    _
  %v14 = vld [vmem:[%s0] sm:$0xff]
  %v15 = vld [vmem:[%s0 + $0x8] sm:$0xff]
  %v16 = vld [vmem:[%s1] sm:$0xff]
  %v17 = vld [vmem:[%s1 + $0x8] sm:$0xff]
  %v18 = vld [vmem:[%s2] sm:$0x1]
  %v20 = vlaneseq
  %v21 = vshrl.u32 %v20, 7
  %v22 = vsub.s32 0, %v21
  %v23 = vrot.slane %v18, %v22
  %vm25 = vcmask 130048
  %v27 = vsel %vm25, %v14, 0
  %v30 = vsel %vm25, %v15, 0
  %32 = vmatprep.subr.mxu0 0.0
  %33 = vmatpush1.msra.mxu0 %v16
  %34 = vmatprep.subr.mxu0 0.0
  %35 = vmatpush1.msra.mxu0 %v17
  %36 = vmatprep.subr.mxu0 0.0
  %37 = vmatpush1.msra.mxu0 0.0
  %38 = vmatprep.subr.mxu0 0.0
  %39 = vmatpush1.msra.mxu0 0.0
  %40 = vmatprep.subr.mxu0 0.0
  %41 = vmatpush1.msra.mxu0 0.0
  %42 = vmatprep.subr.mxu0 0.0
  %43 = vmatpush1.msra.mxu0 0.0
  %44 = vmatprep.subr.mxu0 0.0
  %45 = vmatpush1.msra.mxu0 0.0
  %46 = vmatprep.subr.mxu0 0.0
  %47 = vmatpush1.msra.mxu0 0.0
  %48 = vmatprep.subr.mxu0 0.0
  %49 = vmatpush1.msra.mxu0 0.0
  %50 = vmatprep.subr.mxu0 0.0
  %51 = vmatpush1.msra.mxu0 0.0
  %52 = vmatprep.subr.mxu0 0.0
  %53 = vmatpush1.msra.mxu0 0.0
  %54 = vmatprep.subr.mxu0 0.0
  %55 = vmatpush1.msra.mxu0 0.0
  %56 = vmatprep.subr.mxu0 0.0
  %57 = vmatpush1.msra.mxu0 0.0
  %58 = vmatprep.subr.mxu0 0.0
  %59 = vmatpush1.msra.mxu0 0.0
  %60 = vmatprep.subr.mxu0 0.0
  %61 = vmatpush1.msra.mxu0 0.0
  %62 = vmatprep.subr.mxu0 0.0
  %63 = vmatpush1.msra.mxu0 0.0
  %64 = vmatprep.subr.mxu0 0.0
  %65 = vmatpush1.msra.mxu0 0.0
  %66 = vmatprep.subr.mxu0 0.0
  %67 = vmatpush1.msra.mxu0 0.0
  %68 = vmatprep.subr.mxu0 0.0
  %69 = vmatpush1.msra.mxu0 0.0
  %70 = vmatprep.subr.mxu0 0.0
  %71 = vmatpush1.msra.mxu0 0.0
  %72 = vmatprep.subr.mxu0 0.0
  %73 = vmatpush1.msra.mxu0 0.0
  %74 = vmatprep.subr.mxu0 0.0
  %75 = vmatpush1.msra.mxu0 0.0
  %76 = vmatprep.subr.mxu0 0.0
  %77 = vmatpush1.msra.mxu0 0.0
  %78 = vmatprep.subr.mxu0 0.0
  %79 = vmatpush1.msra.mxu0 0.0
  %80 = vmatprep.subr.mxu0 0.0
  %81 = vmatpush1.msra.mxu0 0.0
  %82 = vmatprep.subr.mxu0 0.0
  %83 = vmatpush1.msra.mxu0 0.0
  %84 = vmatprep.subr.mxu0 0.0
  %85 = vmatpush1.msra.mxu0 0.0
  %86 = vmatprep.subr.mxu0 0.0
  %87 = vmatpush1.msra.mxu0 0.0
  %88 = vmatprep.subr.mxu0 0.0
  %89 = vmatpush1.msra.mxu0 0.0
  %90 = vmatprep.subr.mxu0 0.0
  %91 = vmatpush1.msra.mxu0 0.0
  %92 = vmatprep.subr.mxu0 0.0
  %93 = vmatpush1.msra.mxu0 0.0
  %94 = vmatprep.subr.mxu0 0.0
  %95 = vmatpush1.msra.mxu0 0.0
  %96 = vmatprep.mubr.f32.mxu0 0.0
  %97 = vmatmul.mubr.f32.gmra.mrb[0].mxu0 %v27
  %v98 = vpop.f32.mrb[0].mxu0
  %v99 = vadd.f32 %v23, %v98
  %v100 = vpop.f32.mrb[0].mxu0
  %101 = vmatprep.mubr.f32.mxu0 0.0
  %102 = vmatmul.mubr.f32.gmra.mrb[0].mxu0 %v30
  %v103 = vpop.f32.mrb[0].mxu0
  %v104 = vadd.f32 %v23, %v103
  %v105 = vpop.f32.mrb[0].mxu0
  %106 = vdwg.mxu0
  %107 = vst [vmem:[%s3] sm:$0xff] %v99
  %108 = vst [vmem:[%s3 + $0x8] sm:$0xff] %v104
  // Predicated region
  $region14: #{base_model_forward.5} parent=0 // pred_check
    _
  $region15: #{base_model_forward.5} parent=0 // pred_check_branch
    %110 = sbr.rel (0) target = $region17
  $region16: #{base_model_forward.5} parent=0 // pred_region
    _
  $region17: #{base_model_forward.5} parent=0 // pred_fallthru
    _
  // Predicated region
  $region18: #{base_model_forward.5} parent=0 // pred_check
    _
  $region19: #{base_model_forward.5} parent=0 // pred_check_branch
    %112 = sbr.rel (0) target = $region21
  $region20: #{base_model_forward.5} parent=0 // pred_region
    _
  $region21: #{base_model_forward.5} parent=0 // pred_fallthru
    _

// kernel: base_model_forward.9
$region0: #{base_model_forward.9}
  #allocation0 [shape = 'u32[]', space=smem, size = 0x4, offset = 0x4, fixed_abs, tag = 'smem constant byte address 0x4 - core index']
  #allocation1 [shape = 'u32[144,128]{1,0:T(1,128)}', space=vmem, size = 0x12000, scoped, tag = 'internal scratch']
  %s0 = inlined_call_operand.vmem [shape: f32[16,32], index: 0, kind: input, shape index: {}]
  %s1 = inlined_call_operand.vmem [shape: f32[32,64], index: 1, kind: input, shape index: {}]
  %s2 = inlined_call_operand.vmem [shape: f32[1,64], index: 2, kind: input, shape index: {}]
  %s3 = inlined_call_operand.vmem [shape: f32[64,64], index: 3, kind: input, shape index: {}]
  %s4 = inlined_call_operand.vmem [shape: f32[1,64], index: 4, kind: input, shape index: {}]
  %s5 = inlined_call_operand.hbm [shape: f32[16,64], index: 5, kind: output, shape index: {}]
  %s6 = sld [smem:[#allocation0]]
  $region30: #{base_model_forward.9} parent=0
    _
  %s8 = ssub.s32 1, %s6
  %s9 = scalar_select 0, %s8, %s6
  $region1: #{base_model_forward.9} parent=0
    #allocation2 [shape = 'u8[8192]{0}', space=vmem, size = 0x2000, scoped, tag = 'output window, operand 0, single buffered']
    #allocation3 [shape = 's32[1]{0}', space=sflag, size = 0x4, scoped, tag = 'scoped memory for base_model_forward.9']
    %10 = vsyncpa [#allocation3], 0
    // Predicated region
    $region2: #{base_model_forward.9} parent=1 // pred_check
      _
    $region3: #{base_model_forward.9} parent=1 // pred_check_branch
      %12 = sbr.rel (0) target = $region5
    $region4: #{base_model_forward.9} parent=1 // pred_region
      _
    $region5: #{base_model_forward.9} parent=1 // pred_fallthru
      _
    // Predicated region
    $region6: #{base_model_forward.9} parent=1 // pred_check
      _
    $region7: #{base_model_forward.9} parent=1 // pred_check_branch
      %14 = sbr.rel (0) target = $region9
    $region8: #{base_model_forward.9} parent=1 // pred_region
      _
    $region9: #{base_model_forward.9} parent=1 // pred_fallthru
      _
    // Predicated region
    $region10: #{base_model_forward.9} parent=1 // pred_check
      _
    $region11: #{base_model_forward.9} parent=1 // pred_check_branch
      %16 = sbr.rel (0) target = $region13
    $region12: #{base_model_forward.9} parent=1 // pred_region
      _
    $region13: #{base_model_forward.9} parent=1 // pred_fallthru
      _
    // Predicated region
    $region14: #{base_model_forward.9} parent=1 // pred_check
      _
    $region15: #{base_model_forward.9} parent=1 // pred_check_branch
      %18 = sbr.rel (0) target = $region17
    $region16: #{base_model_forward.9} parent=1 // pred_region
      _
    $region17: #{base_model_forward.9} parent=1 // pred_fallthru
      _
    // Predicated region
    $region18: #{base_model_forward.9} parent=1 // pred_check
      _
    $region19: #{base_model_forward.9} parent=1 // pred_check_branch
      %20 = sbr.rel (0) target = $region21
    $region20: #{base_model_forward.9} parent=1 // pred_region
      _
    $region21: #{base_model_forward.9} parent=1 // pred_fallthru
      _
    %v21 = vld [vmem:[%s0] sm:$0xff]
    %v22 = vld [vmem:[%s0 + $0x8] sm:$0xff]
    %v23 = vld [vmem:[%s1] sm:$0xff]
    %v24 = vld [vmem:[%s1 + $0x8] sm:$0xff]
    %v25 = vld [vmem:[%s1 + $0x10] sm:$0xff]
    %v26 = vld [vmem:[%s1 + $0x18] sm:$0xff]
    %v27 = vld [vmem:[%s2] sm:$0x1]
    %v29 = vlaneseq
    %v30 = vshrl.u32 %v29, 7
    %v31 = vsub.s32 0, %v30
    %v32 = vrot.slane %v27, %v31
    %vm34 = vcmask 261120
    %v36 = vsel %vm34, %v21, 0
    %v39 = vsel %vm34, %v22, 0
    %41 = vmatprep.subr.mxu0 0.0
    %42 = vmatpush1.msra.mxu0 %v23
    %43 = vmatprep.subr.mxu0 0.0
    %44 = vmatpush1.msra.mxu0 %v24
    %45 = vmatprep.subr.mxu0 0.0
    %46 = vmatpush1.msra.mxu0 %v25
    %47 = vmatprep.subr.mxu0 0.0
    %48 = vmatpush1.msra.mxu0 %v26
    %49 = vmatprep.subr.mxu0 0.0
    %50 = vmatpush1.msra.mxu0 0.0
    %51 = vmatprep.subr.mxu0 0.0
    %52 = vmatpush1.msra.mxu0 0.0
    %53 = vmatprep.subr.mxu0 0.0
    %54 = vmatpush1.msra.mxu0 0.0
    %55 = vmatprep.subr.mxu0 0.0
    %56 = vmatpush1.msra.mxu0 0.0
    %57 = vmatprep.subr.mxu0 0.0
    %58 = vmatpush1.msra.mxu0 0.0
    %59 = vmatprep.subr.mxu0 0.0
    %60 = vmatpush1.msra.mxu0 0.0
    %61 = vmatprep.subr.mxu0 0.0
    %62 = vmatpush1.msra.mxu0 0.0
    %63 = vmatprep.subr.mxu0 0.0
    %64 = vmatpush1.msra.mxu0 0.0
    %65 = vmatprep.subr.mxu0 0.0
    %66 = vmatpush1.msra.mxu0 0.0
    %67 = vmatprep.subr.mxu0 0.0
    %68 = vmatpush1.msra.mxu0 0.0
    %69 = vmatprep.subr.mxu0 0.0
    %70 = vmatpush1.msra.mxu0 0.0
    %71 = vmatprep.subr.mxu0 0.0
    %72 = vmatpush1.msra.mxu0 0.0
    %73 = vmatprep.subr.mxu0 0.0
    %74 = vmatpush1.msra.mxu0 0.0
    %75 = vmatprep.subr.mxu0 0.0
    %76 = vmatpush1.msra.mxu0 0.0
    %77 = vmatprep.subr.mxu0 0.0
    %78 = vmatpush1.msra.mxu0 0.0
    %79 = vmatprep.subr.mxu0 0.0
    %80 = vmatpush1.msra.mxu0 0.0
    %81 = vmatprep.subr.mxu0 0.0
    %82 = vmatpush1.msra.mxu0 0.0
    %83 = vmatprep.subr.mxu0 0.0
    %84 = vmatpush1.msra.mxu0 0.0
    %85 = vmatprep.subr.mxu0 0.0
    %86 = vmatpush1.msra.mxu0 0.0
    %87 = vmatprep.subr.mxu0 0.0
    %88 = vmatpush1.msra.mxu0 0.0
    %89 = vmatprep.subr.mxu0 0.0
    %90 = vmatpush1.msra.mxu0 0.0
    %91 = vmatprep.subr.mxu0 0.0
    %92 = vmatpush1.msra.mxu0 0.0
    %93 = vmatprep.subr.mxu0 0.0
    %94 = vmatpush1.msra.mxu0 0.0
    %95 = vmatprep.subr.mxu0 0.0
    %96 = vmatpush1.msra.mxu0 0.0
    %97 = vmatprep.subr.mxu0 0.0
    %98 = vmatpush1.msra.mxu0 0.0
    %99 = vmatprep.subr.mxu0 0.0
    %100 = vmatpush1.msra.mxu0 0.0
    %101 = vmatprep.subr.mxu0 0.0
    %102 = vmatpush1.msra.mxu0 0.0
    %103 = vmatprep.subr.mxu0 0.0
    %104 = vmatpush1.msra.mxu0 0.0
    %105 = vmatprep.mubr.f32.mxu0 0.0
    %106 = vmatmul.mubr.f32.gmra.mrb[0].mxu0 %v36
    %v107 = vpop.f32.mrb[0].mxu0
    %v108 = vadd.f32 %v32, %v107
    %v109 = vpop.f32.mrb[0].mxu0
    %110 = vmatprep.mubr.f32.mxu0 0.0
    %111 = vmatmul.mubr.f32.gmra.mrb[0].mxu0 %v39
    %v112 = vpop.f32.mrb[0].mxu0
    %v113 = vadd.f32 %v32, %v112
    %v114 = vpop.f32.mrb[0].mxu0
    %115 = vdwg.mxu0
    %v116 = vmax.f32 %v108, 0.0
    %v117 = vmax.f32 %v113, 0.0
    %v118 = vld [vmem:[%s3] sm:$0xff]
    %v119 = vld [vmem:[%s3 + $0x8] sm:$0xff]
    %v120 = vld [vmem:[%s3 + $0x10] sm:$0xff]
    %v121 = vld [vmem:[%s3 + $0x18] sm:$0xff]
    %v122 = vld [vmem:[%s3 + $0x20] sm:$0xff]
    %v123 = vld [vmem:[%s3 + $0x28] sm:$0xff]
    %v124 = vld [vmem:[%s3 + $0x30] sm:$0xff]
    %v125 = vld [vmem:[%s3 + $0x38] sm:$0xff]
    %v126 = vld [vmem:[%s4] sm:$0x1]
    %v128 = vlaneseq
    %v129 = vshrl.u32 %v128, 7
    %v130 = vsub.s32 0, %v129
    %v131 = vrot.slane %v126, %v130
    %vm133 = vcmask 523264
    %v135 = vsel %vm133, %v116, 0
    %v138 = vsel %vm133, %v117, 0
    %140 = vmatprep.subr.mxu0 0.0
    %141 = vmatpush1.msra.mxu0 %v118
    %142 = vmatprep.subr.mxu0 0.0
    %143 = vmatpush1.msra.mxu0 %v119
    %144 = vmatprep.subr.mxu0 0.0
    %145 = vmatpush1.msra.mxu0 %v120
    %146 = vmatprep.subr.mxu0 0.0
    %147 = vmatpush1.msra.mxu0 %v121
    %148 = vmatprep.subr.mxu0 0.0
    %149 = vmatpush1.msra.mxu0 %v122
    %150 = vmatprep.subr.mxu0 0.0
    %151 = vmatpush1.msra.mxu0 %v123
    %152 = vmatprep.subr.mxu0 0.0
    %153 = vmatpush1.msra.mxu0 %v124
    %154 = vmatprep.subr.mxu0 0.0
    %155 = vmatpush1.msra.mxu0 %v125
    %156 = vmatprep.subr.mxu0 0.0
    %157 = vmatpush1.msra.mxu0 0.0
    %158 = vmatprep.subr.mxu0 0.0
    %159 = vmatpush1.msra.mxu0 0.0
    %160 = vmatprep.subr.mxu0 0.0
    %161 = vmatpush1.msra.mxu0 0.0
    %162 = vmatprep.subr.mxu0 0.0
    %163 = vmatpush1.msra.mxu0 0.0
    %164 = vmatprep.subr.mxu0 0.0
    %165 = vmatpush1.msra.mxu0 0.0
    %166 = vmatprep.subr.mxu0 0.0
    %167 = vmatpush1.msra.mxu0 0.0
    %168 = vmatprep.subr.mxu0 0.0
    %169 = vmatpush1.msra.mxu0 0.0
    %170 = vmatprep.subr.mxu0 0.0
    %171 = vmatpush1.msra.mxu0 0.0
    %172 = vmatprep.subr.mxu0 0.0
    %173 = vmatpush1.msra.mxu0 0.0
    %174 = vmatprep.subr.mxu0 0.0
    %175 = vmatpush1.msra.mxu0 0.0
    %176 = vmatprep.subr.mxu0 0.0
    %177 = vmatpush1.msra.mxu0 0.0
    %178 = vmatprep.subr.mxu0 0.0
    %179 = vmatpush1.msra.mxu0 0.0
    %180 = vmatprep.subr.mxu0 0.0
    %181 = vmatpush1.msra.mxu0 0.0
    %182 = vmatprep.subr.mxu0 0.0
    %183 = vmatpush1.msra.mxu0 0.0
    %184 = vmatprep.subr.mxu0 0.0
    %185 = vmatpush1.msra.mxu0 0.0
    %186 = vmatprep.subr.mxu0 0.0
    %187 = vmatpush1.msra.mxu0 0.0
    %188 = vmatprep.subr.mxu0 0.0
    %189 = vmatpush1.msra.mxu0 0.0
    %190 = vmatprep.subr.mxu0 0.0
    %191 = vmatpush1.msra.mxu0 0.0
    %192 = vmatprep.subr.mxu0 0.0
    %193 = vmatpush1.msra.mxu0 0.0
    %194 = vmatprep.subr.mxu0 0.0
    %195 = vmatpush1.msra.mxu0 0.0
    %196 = vmatprep.subr.mxu0 0.0
    %197 = vmatpush1.msra.mxu0 0.0
    %198 = vmatprep.subr.mxu0 0.0
    %199 = vmatpush1.msra.mxu0 0.0
    %200 = vmatprep.subr.mxu0 0.0
    %201 = vmatpush1.msra.mxu0 0.0
    %202 = vmatprep.subr.mxu0 0.0
    %203 = vmatpush1.msra.mxu0 0.0
    %204 = vmatprep.mubr.f32.mxu0 0.0
    %205 = vmatmul.mubr.f32.gmra.mrb[0].mxu0 %v135
    %v206 = vpop.f32.mrb[0].mxu0
    %v207 = vadd.f32 %v131, %v206
    %v208 = vpop.f32.mrb[0].mxu0
    %209 = vmatprep.mubr.f32.mxu0 0.0
    %210 = vmatmul.mubr.f32.gmra.mrb[0].mxu0 %v138
    %v211 = vpop.f32.mrb[0].mxu0
    %v212 = vadd.f32 %v131, %v211
    %v213 = vpop.f32.mrb[0].mxu0
    %214 = vdwg.mxu0
    %215 = vst.msk [vmem:[#allocation2] sm:$0xff] %vm133, %v207
    %216 = vst.msk [vmem:[#allocation2 + $0x8] sm:$0xff] %vm133, %v212
    // Predicated region
    $region22: #{base_model_forward.9} parent=1 // pred_check
      _
    $region23: #{base_model_forward.9} parent=1 // pred_check_branch
      %218 = sbr.rel (0) target = $region25
    $region24: #{base_model_forward.9} parent=1 // pred_region
      %s220 = ssub.s32 256, 256
      %221 = vsyncadd [#allocation3], %s220
      %s222 = sshll.u32 [#allocation2], 4
      %s223 = int_to_ptr.vmem [resolvable:$true] %s222
      %228 = dma.vmem_to_hbm [thread:$0]  %s223, 256, %s5, [#allocation3], 128, 128, 8
    $region25: #{base_model_forward.9} parent=1 // pred_fallthru
      _
    // Predicated region
    $region26: #{base_model_forward.9} parent=1 // pred_check
      _
    $region27: #{base_model_forward.9} parent=1 // pred_check_branch
      %230 = sbr.rel (0) target = $region29
    $region28: #{base_model_forward.9} parent=1 // pred_region
      %231 = dma.done [#allocation3], 256
    $region29: #{base_model_forward.9} parent=1 // pred_fallthru
      _
    %232 = vsyncpa [#allocation3], 1

// kernel: base_model_forward.7
$region0: #{base_model_forward.7}
  #allocation0 [shape = 'u32[]', space=smem, size = 0x4, offset = 0x4, fixed_abs, tag = 'smem constant byte address 0x4 - core index']
  #allocation1 [shape = 'u32[144,128]{1,0:T(1,128)}', space=vmem, size = 0x12000, scoped, tag = 'internal scratch']
  %s0 = inlined_call_operand.vmem [shape: f32[16,32], index: 0, kind: input, shape index: {}]
  %s1 = inlined_call_operand.vmem [shape: f32[32,128], index: 1, kind: input, shape index: {}]
  %s2 = inlined_call_operand.vmem [shape: f32[1,128], index: 2, kind: input, shape index: {}]
  %s3 = inlined_call_operand.vmem [shape: f32[16,128], index: 3, kind: output, shape index: {}]
  %s4 = sld [smem:[#allocation0]]
  $region22: #{base_model_forward.7} parent=0
    _
  %s6 = ssub.s32 1, %s4
  %s7 = scalar_select 0, %s6, %s4
  // Predicated region
  $region2: #{base_model_forward.7} parent=0 // pred_check
    _
  $region3: #{base_model_forward.7} parent=0 // pred_check_branch
    %9 = sbr.rel (0) target = $region5
  $region4: #{base_model_forward.7} parent=0 // pred_region
    _
  $region5: #{base_model_forward.7} parent=0 // pred_fallthru
    _
  // Predicated region
  $region6: #{base_model_forward.7} parent=0 // pred_check
    _
  $region7: #{base_model_forward.7} parent=0 // pred_check_branch
    %11 = sbr.rel (0) target = $region9
  $region8: #{base_model_forward.7} parent=0 // pred_region
    _
  $region9: #{base_model_forward.7} parent=0 // pred_fallthru
    _
  // Predicated region
  $region10: #{base_model_forward.7} parent=0 // pred_check
    _
  $region11: #{base_model_forward.7} parent=0 // pred_check_branch
    %13 = sbr.rel (0) target = $region13
  $region12: #{base_model_forward.7} parent=0 // pred_region
    _
  $region13: #{base_model_forward.7} parent=0 // pred_fallthru
    _
  %v14 = vld [vmem:[%s0] sm:$0xff]
  %v15 = vld [vmem:[%s0 + $0x8] sm:$0xff]
  %v16 = vld [vmem:[%s1] sm:$0xff]
  %v17 = vld [vmem:[%s1 + $0x8] sm:$0xff]
  %v18 = vld [vmem:[%s1 + $0x10] sm:$0xff]
  %v19 = vld [vmem:[%s1 + $0x18] sm:$0xff]
  %v20 = vld [vmem:[%s2] sm:$0x1]
  %v22 = vlaneseq
  %v23 = vshrl.u32 %v22, 7
  %v24 = vsub.s32 0, %v23
  %v25 = vrot.slane %v20, %v24
  %vm27 = vcmask 261120
  %v29 = vsel %vm27, %v14, 0
  %v32 = vsel %vm27, %v15, 0
  %34 = vmatprep.subr.mxu0 0.0
  %35 = vmatpush1.msra.mxu0 %v16
  %36 = vmatprep.subr.mxu0 0.0
  %37 = vmatpush1.msra.mxu0 %v17
  %38 = vmatprep.subr.mxu0 0.0
  %39 = vmatpush1.msra.mxu0 %v18
  %40 = vmatprep.subr.mxu0 0.0
  %41 = vmatpush1.msra.mxu0 %v19
  %42 = vmatprep.subr.mxu0 0.0
  %43 = vmatpush1.msra.mxu0 0.0
  %44 = vmatprep.subr.mxu0 0.0
  %45 = vmatpush1.msra.mxu0 0.0
  %46 = vmatprep.subr.mxu0 0.0
  %47 = vmatpush1.msra.mxu0 0.0
  %48 = vmatprep.subr.mxu0 0.0
  %49 = vmatpush1.msra.mxu0 0.0
  %50 = vmatprep.subr.mxu0 0.0
  %51 = vmatpush1.msra.mxu0 0.0
  %52 = vmatprep.subr.mxu0 0.0
  %53 = vmatpush1.msra.mxu0 0.0
  %54 = vmatprep.subr.mxu0 0.0
  %55 = vmatpush1.msra.mxu0 0.0
  %56 = vmatprep.subr.mxu0 0.0
  %57 = vmatpush1.msra.mxu0 0.0
  %58 = vmatprep.subr.mxu0 0.0
  %59 = vmatpush1.msra.mxu0 0.0
  %60 = vmatprep.subr.mxu0 0.0
  %61 = vmatpush1.msra.mxu0 0.0
  %62 = vmatprep.subr.mxu0 0.0
  %63 = vmatpush1.msra.mxu0 0.0
  %64 = vmatprep.subr.mxu0 0.0
  %65 = vmatpush1.msra.mxu0 0.0
  %66 = vmatprep.subr.mxu0 0.0
  %67 = vmatpush1.msra.mxu0 0.0
  %68 = vmatprep.subr.mxu0 0.0
  %69 = vmatpush1.msra.mxu0 0.0
  %70 = vmatprep.subr.mxu0 0.0
  %71 = vmatpush1.msra.mxu0 0.0
  %72 = vmatprep.subr.mxu0 0.0
  %73 = vmatpush1.msra.mxu0 0.0
  %74 = vmatprep.subr.mxu0 0.0
  %75 = vmatpush1.msra.mxu0 0.0
  %76 = vmatprep.subr.mxu0 0.0
  %77 = vmatpush1.msra.mxu0 0.0
  %78 = vmatprep.subr.mxu0 0.0
  %79 = vmatpush1.msra.mxu0 0.0
  %80 = vmatprep.subr.mxu0 0.0
  %81 = vmatpush1.msra.mxu0 0.0
  %82 = vmatprep.subr.mxu0 0.0
  %83 = vmatpush1.msra.mxu0 0.0
  %84 = vmatprep.subr.mxu0 0.0
  %85 = vmatpush1.msra.mxu0 0.0
  %86 = vmatprep.subr.mxu0 0.0
  %87 = vmatpush1.msra.mxu0 0.0
  %88 = vmatprep.subr.mxu0 0.0
  %89 = vmatpush1.msra.mxu0 0.0
  %90 = vmatprep.subr.mxu0 0.0
  %91 = vmatpush1.msra.mxu0 0.0
  %92 = vmatprep.subr.mxu0 0.0
  %93 = vmatpush1.msra.mxu0 0.0
  %94 = vmatprep.subr.mxu0 0.0
  %95 = vmatpush1.msra.mxu0 0.0
  %96 = vmatprep.subr.mxu0 0.0
  %97 = vmatpush1.msra.mxu0 0.0
  %98 = vmatprep.mubr.f32.mxu0 0.0
  %99 = vmatmul.mubr.f32.gmra.mrb[0].mxu0 %v29
  %v100 = vpop.f32.mrb[0].mxu0
  %v101 = vadd.f32 %v25, %v100
  %v102 = vpop.f32.mrb[0].mxu0
  %103 = vmatprep.mubr.f32.mxu0 0.0
  %104 = vmatmul.mubr.f32.gmra.mrb[0].mxu0 %v32
  %v105 = vpop.f32.mrb[0].mxu0
  %v106 = vadd.f32 %v25, %v105
  %v107 = vpop.f32.mrb[0].mxu0
  %108 = vdwg.mxu0
  %109 = vst [vmem:[%s3] sm:$0xff] %v101
  %110 = vst [vmem:[%s3 + $0x8] sm:$0xff] %v106
  // Predicated region
  $region14: #{base_model_forward.7} parent=0 // pred_check
    _
  $region15: #{base_model_forward.7} parent=0 // pred_check_branch
    %112 = sbr.rel (0) target = $region17
  $region16: #{base_model_forward.7} parent=0 // pred_region
    _
  $region17: #{base_model_forward.7} parent=0 // pred_fallthru
    _
  // Predicated region
  $region18: #{base_model_forward.7} parent=0 // pred_check
    _
  $region19: #{base_model_forward.7} parent=0 // pred_check_branch
    %114 = sbr.rel (0) target = $region21
  $region20: #{base_model_forward.7} parent=0 // pred_region
    _
  $region21: #{base_model_forward.7} parent=0 // pred_fallthru
    _

// kernel: base_model_forward.6
$region0: #{base_model_forward.6}
  #allocation0 [shape = 'u32[]', space=smem, size = 0x4, offset = 0x4, fixed_abs, tag = 'smem constant byte address 0x4 - core index']
  #allocation1 [shape = 'u32[144,128]{1,0:T(1,128)}', space=vmem, size = 0x12000, scoped, tag = 'internal scratch']
  #allocation2 [shape = 'f32[2,32]{1,0:T(2,128)}', space=vmem, size = 0x400, scoped, tag = 'scratch operand']
  #allocation3 [shape = 'f32[2,32]{1,0:T(2,128)}', space=vmem, size = 0x400, scoped, tag = 'scratch operand']
  #allocation4 [shape = 'f32[8,2,32]{2,1,0:T(2,128)}', space=vmem, size = 0x2000, scoped, tag = 'scratch operand']
  %s0 = inlined_call_operand.vmem [shape: f32[8,2,128], index: 0, kind: input, shape index: {}]
  %s1 = inlined_call_operand.vmem [shape: f32[32,128], index: 1, kind: input, shape index: {}]
  %s2 = inlined_call_operand.vmem [shape: f32[8,2,32], index: 2, kind: output, shape index: {0}]
  %s3 = inlined_call_operand.vmem [shape: f32[2,32], index: 3, kind: output, shape index: {1}]
  %s4 = inlined_call_operand.vmem [shape: f32[2,32], index: 4, kind: output, shape index: {2}]
  %5 = xla_tuple %s2, %s3, %s4
  %s6 = sld [smem:[#allocation0]]
  $region42: #{base_model_forward.6} parent=0
    _
  %s8 = ssub.s32 1, %s6
  %s9 = scalar_select 0, %s8, %s6
  // Predicated region
  $region2: #{base_model_forward.6} parent=0 // pred_check
    _
  $region3: #{base_model_forward.6} parent=0 // pred_check_branch
    %11 = sbr.rel (0) target = $region5
  $region4: #{base_model_forward.6} parent=0 // pred_region
    _
  $region5: #{base_model_forward.6} parent=0 // pred_fallthru
    _
  // Predicated region
  $region6: #{base_model_forward.6} parent=0 // pred_check
    _
  $region7: #{base_model_forward.6} parent=0 // pred_check_branch
    %13 = sbr.rel (0) target = $region9
  $region8: #{base_model_forward.6} parent=0 // pred_region
    _
  $region9: #{base_model_forward.6} parent=0 // pred_fallthru
    _
  %p14 = scmp.eq.s32.totalorder 0, 0
  // Predicated region
  $region10: #{base_model_forward.6} parent=0 // pred_check
    %p15 = pneg %p14
  $region11: #{base_model_forward.6} parent=0 // pred_check_branch
    %17 = sbr.rel (%p15) target = $region13
  $region12: #{base_model_forward.6} parent=0 // pred_region
    %vm18 = vcmask 254976
    %19 = vst.msk [vmem:[#allocation2] sm:$0x3] %vm18, 0.0
    %20 = vst.msk [vmem:[#allocation3] sm:$0x3] %vm18, 0.0
  $region13: #{base_model_forward.6} parent=0 // pred_fallthru
    _
  %v21 = vld [vmem:[%s1] sm:$0xff]
  %v22 = vld [vmem:[%s1 + $0x8] sm:$0xff]
  %v23 = vld [vmem:[%s1 + $0x10] sm:$0xff]
  %v24 = vld [vmem:[%s1 + $0x18] sm:$0xff]
  %v25 = vld [vmem:[#allocation2] sm:$0x3]
  %v26 = vld [vmem:[#allocation3] sm:$0x3]
  %v27 = vld [vmem:[%s0] sm:$0x3]
  %vm28 = vcmask 261120
  %v30 = vsel %vm28, %v25, 0
  %32 = vmatprep.subr.mxu0 0.0
  %33 = vmatpush1.msra.mxu0 %v21
  %34 = vmatprep.subr.mxu0 0.0
  %35 = vmatpush1.msra.mxu0 %v22
  %36 = vmatprep.subr.mxu0 0.0
  %37 = vmatpush1.msra.mxu0 %v23
  %38 = vmatprep.subr.mxu0 0.0
  %39 = vmatpush1.msra.mxu0 %v24
  %40 = vmatprep.subr.mxu0 0.0
  %41 = vmatpush1.msra.mxu0 0.0
  %42 = vmatprep.subr.mxu0 0.0
  %43 = vmatpush1.msra.mxu0 0.0
  %44 = vmatprep.subr.mxu0 0.0
  %45 = vmatpush1.msra.mxu0 0.0
  %46 = vmatprep.subr.mxu0 0.0
  %47 = vmatpush1.msra.mxu0 0.0
  %48 = vmatprep.subr.mxu0 0.0
  %49 = vmatpush1.msra.mxu0 0.0
  %50 = vmatprep.subr.mxu0 0.0
  %51 = vmatpush1.msra.mxu0 0.0
  %52 = vmatprep.subr.mxu0 0.0
  %53 = vmatpush1.msra.mxu0 0.0
  %54 = vmatprep.subr.mxu0 0.0
  %55 = vmatpush1.msra.mxu0 0.0
  %56 = vmatprep.subr.mxu0 0.0
  %57 = vmatpush1.msra.mxu0 0.0
  %58 = vmatprep.subr.mxu0 0.0
  %59 = vmatpush1.msra.mxu0 0.0
  %60 = vmatprep.subr.mxu0 0.0
  %61 = vmatpush1.msra.mxu0 0.0
  %62 = vmatprep.subr.mxu0 0.0
  %63 = vmatpush1.msra.mxu0 0.0
  %64 = vmatprep.subr.mxu0 0.0
  %65 = vmatpush1.msra.mxu0 0.0
  %66 = vmatprep.subr.mxu0 0.0
  %67 = vmatpush1.msra.mxu0 0.0
  %68 = vmatprep.subr.mxu0 0.0
  %69 = vmatpush1.msra.mxu0 0.0
  %70 = vmatprep.subr.mxu0 0.0
  %71 = vmatpush1.msra.mxu0 0.0
  %72 = vmatprep.subr.mxu0 0.0
  %73 = vmatpush1.msra.mxu0 0.0
  %74 = vmatprep.subr.mxu0 0.0
  %75 = vmatpush1.msra.mxu0 0.0
  %76 = vmatprep.subr.mxu0 0.0
  %77 = vmatpush1.msra.mxu0 0.0
  %78 = vmatprep.subr.mxu0 0.0
  %79 = vmatpush1.msra.mxu0 0.0
  %80 = vmatprep.subr.mxu0 0.0
  %81 = vmatpush1.msra.mxu0 0.0
  %82 = vmatprep.subr.mxu0 0.0
  %83 = vmatpush1.msra.mxu0 0.0
  %84 = vmatprep.subr.mxu0 0.0
  %85 = vmatpush1.msra.mxu0 0.0
  %86 = vmatprep.subr.mxu0 0.0
  %87 = vmatpush1.msra.mxu0 0.0
  %88 = vmatprep.subr.mxu0 0.0
  %89 = vmatpush1.msra.mxu0 0.0
  %90 = vmatprep.subr.mxu0 0.0
  %91 = vmatpush1.msra.mxu0 0.0
  %92 = vmatprep.subr.mxu0 0.0
  %93 = vmatpush1.msra.mxu0 0.0
  %94 = vmatprep.subr.mxu0 0.0
  %95 = vmatpush1.msra.mxu0 0.0
  %96 = vmatprep.mubr.f32.mxu0 0.0
  %97 = vmatmul.mubr.f32.gmra.mrb[0].mxu0 %v30
  %v98 = vpop.f32.mrb[0].mxu0
  %v99 = vadd.f32 0.0, %v98
  %v100 = vpop.f32.mrb[0].mxu0
  %101 = vdwg.mxu0
  %v102 = vadd.f32 %v27, %v99
  %v103 = vxor.u32 %v102, 2147483648
  %v104 = vmul.f32 %v103, 1.442695
  %v105 = vpow.pop %v104
  %v106 = vadd.f32 %v105, 1.0
  %v107 = vrcp.pop %v106
  %v108 = vmul.f32 1.0, %v107
  %v109 = vtanh.pop %v102
  %111 = vrot.lane.b32.xlu0 %v26, 32
  %v112 = vpop.permute.xlu0 %111
  %v114 = vmul.f32 %v108, %v112
  %116 = vrot.lane.b32.xlu0 %v109, 64
  %v117 = vpop.permute.xlu0 %116
  %v119 = vmul.f32 %v108, %v117
  %121 = vrot.lane.b32.xlu0 %v119, 32
  %v122 = vpop.permute.xlu0 %121
  %v124 = vadd.f32 %v114, %v122
  %v125 = vtanh.pop %v124
  %127 = vrot.lane.b32.xlu0 %v125, 64
  %v128 = vpop.permute.xlu0 %127
  %v130 = vmul.f32 %v108, %v128
  %132 = vrot.lane.b32.xlu0 %v130, 32
  %v133 = vpop.permute.xlu0 %132
  %vm135 = vcmask 254976
  %136 = vst.msk [vmem:[#allocation2] sm:$0x3] %vm135, %v133
  %138 = vrot.lane.b32.xlu0 %v124, 96
  %v139 = vpop.permute.xlu0 %138
  %141 = vst.msk [vmem:[#allocation3] sm:$0x3] %vm135, %v139
  %142 = vst.msk [vmem:[#allocation4] sm:$0x3] %vm135, %v133
  %v143 = vld [vmem:[#allocation2] sm:$0x3]
  %v144 = vld [vmem:[#allocation3] sm:$0x3]
  %s145 = scalar_lea.vmem %s0, 2
  %v146 = vld [vmem:[%s145] sm:$0x3]
  %v148 = vsel %vm28, %v143, 0
  %150 = vmatprep.subr.mxu0 0.0
  %151 = vmatpush1.msra.mxu0 %v21
  %152 = vmatprep.subr.mxu0 0.0
  %153 = vmatpush1.msra.mxu0 %v22
  %154 = vmatprep.subr.mxu0 0.0
  %155 = vmatpush1.msra.mxu0 %v23
  %156 = vmatprep.subr.mxu0 0.0
  %157 = vmatpush1.msra.mxu0 %v24
  %158 = vmatprep.subr.mxu0 0.0
  %159 = vmatpush1.msra.mxu0 0.0
  %160 = vmatprep.subr.mxu0 0.0
  %161 = vmatpush1.msra.mxu0 0.0
  %162 = vmatprep.subr.mxu0 0.0
  %163 = vmatpush1.msra.mxu0 0.0
  %164 = vmatprep.subr.mxu0 0.0
  %165 = vmatpush1.msra.mxu0 0.0
  %166 = vmatprep.subr.mxu0 0.0
  %167 = vmatpush1.msra.mxu0 0.0
  %168 = vmatprep.subr.mxu0 0.0
  %169 = vmatpush1.msra.mxu0 0.0
  %170 = vmatprep.subr.mxu0 0.0
  %171 = vmatpush1.msra.mxu0 0.0
  %172 = vmatprep.subr.mxu0 0.0
  %173 = vmatpush1.msra.mxu0 0.0
  %174 = vmatprep.subr.mxu0 0.0
  %175 = vmatpush1.msra.mxu0 0.0
  %176 = vmatprep.subr.mxu0 0.0
  %177 = vmatpush1.msra.mxu0 0.0
  %178 = vmatprep.subr.mxu0 0.0
  %179 = vmatpush1.msra.mxu0 0.0
  %180 = vmatprep.subr.mxu0 0.0
  %181 = vmatpush1.msra.mxu0 0.0
  %182 = vmatprep.subr.mxu0 0.0
  %183 = vmatpush1.msra.mxu0 0.0
  %184 = vmatprep.subr.mxu0 0.0
  %185 = vmatpush1.msra.mxu0 0.0
  %186 = vmatprep.subr.mxu0 0.0
  %187 = vmatpush1.msra.mxu0 0.0
  %188 = vmatprep.subr.mxu0 0.0
  %189 = vmatpush1.msra.mxu0 0.0
  %190 = vmatprep.subr.mxu0 0.0
  %191 = vmatpush1.msra.mxu0 0.0
  %192 = vmatprep.subr.mxu0 0.0
  %193 = vmatpush1.msra.mxu0 0.0
  %194 = vmatprep.subr.mxu0 0.0
  %195 = vmatpush1.msra.mxu0 0.0
  %196 = vmatprep.subr.mxu0 0.0
  %197 = vmatpush1.msra.mxu0 0.0
  %198 = vmatprep.subr.mxu0 0.0
  %199 = vmatpush1.msra.mxu0 0.0
  %200 = vmatprep.subr.mxu0 0.0
  %201 = vmatpush1.msra.mxu0 0.0
  %202 = vmatprep.subr.mxu0 0.0
  %203 = vmatpush1.msra.mxu0 0.0
  %204 = vmatprep.subr.mxu0 0.0
  %205 = vmatpush1.msra.mxu0 0.0
  %206 = vmatprep.subr.mxu0 0.0
  %207 = vmatpush1.msra.mxu0 0.0
  %208 = vmatprep.subr.mxu0 0.0
  %209 = vmatpush1.msra.mxu0 0.0
  %210 = vmatprep.subr.mxu0 0.0
  %211 = vmatpush1.msra.mxu0 0.0
  %212 = vmatprep.subr.mxu0 0.0
  %213 = vmatpush1.msra.mxu0 0.0
  %214 = vmatprep.mubr.f32.mxu0 0.0
  %215 = vmatmul.mubr.f32.gmra.mrb[0].mxu0 %v148
  %v216 = vpop.f32.mrb[0].mxu0
  %v217 = vadd.f32 0.0, %v216
  %v218 = vpop.f32.mrb[0].mxu0
  %219 = vdwg.mxu0
  %v220 = vadd.f32 %v146, %v217
  %v221 = vxor.u32 %v220, 2147483648
  %v222 = vmul.f32 %v221, 1.442695
  %v223 = vpow.pop %v222
  %v224 = vadd.f32 %v223, 1.0
  %v225 = vrcp.pop %v224
  %v226 = vmul.f32 1.0, %v225
  %v227 = vtanh.pop %v220
  %229 = vrot.lane.b32.xlu0 %v144, 32
  %v230 = vpop.permute.xlu0 %229
  %v232 = vmul.f32 %v226, %v230
  %234 = vrot.lane.b32.xlu0 %v227, 64
  %v235 = vpop.permute.xlu0 %234
  %v237 = vmul.f32 %v226, %v235
  %239 = vrot.lane.b32.xlu0 %v237, 32
  %v240 = vpop.permute.xlu0 %239
  %v242 = vadd.f32 %v232, %v240
  %v243 = vtanh.pop %v242
  %245 = vrot.lane.b32.xlu0 %v243, 64
  %v246 = vpop.permute.xlu0 %245
  %v248 = vmul.f32 %v226, %v246
  %250 = vrot.lane.b32.xlu0 %v248, 32
  %v251 = vpop.permute.xlu0 %250
  %253 = vst.msk [vmem:[#allocation2] sm:$0x3] %vm135, %v251
  %255 = vrot.lane.b32.xlu0 %v242, 96
  %v256 = vpop.permute.xlu0 %255
  %258 = vst.msk [vmem:[#allocation3] sm:$0x3] %vm135, %v256
  %s259 = scalar_lea.vmem [#allocation4], 2
  %260 = vst.msk [vmem:[%s259] sm:$0x3] %vm135, %v251
  %v261 = vld [vmem:[#allocation2] sm:$0x3]
  %v262 = vld [vmem:[#allocation3] sm:$0x3]
  %s263 = scalar_lea.vmem %s0, 4
  %v264 = vld [vmem:[%s263] sm:$0x3]
  %v266 = vsel %vm28, %v261, 0
  %268 = vmatprep.subr.mxu0 0.0
  %269 = vmatpush1.msra.mxu0 %v21
  %270 = vmatprep.subr.mxu0 0.0
  %271 = vmatpush1.msra.mxu0 %v22
  %272 = vmatprep.subr.mxu0 0.0
  %273 = vmatpush1.msra.mxu0 %v23
  %274 = vmatprep.subr.mxu0 0.0
  %275 = vmatpush1.msra.mxu0 %v24
  %276 = vmatprep.subr.mxu0 0.0
  %277 = vmatpush1.msra.mxu0 0.0
  %278 = vmatprep.subr.mxu0 0.0
  %279 = vmatpush1.msra.mxu0 0.0
  %280 = vmatprep.subr.mxu0 0.0
  %281 = vmatpush1.msra.mxu0 0.0
  %282 = vmatprep.subr.mxu0 0.0
  %283 = vmatpush1.msra.mxu0 0.0
  %284 = vmatprep.subr.mxu0 0.0
  %285 = vmatpush1.msra.mxu0 0.0
  %286 = vmatprep.subr.mxu0 0.0
  %287 = vmatpush1.msra.mxu0 0.0
  %288 = vmatprep.subr.mxu0 0.0
  %289 = vmatpush1.msra.mxu0 0.0
  %290 = vmatprep.subr.mxu0 0.0
  %291 = vmatpush1.msra.mxu0 0.0
  %292 = vmatprep.subr.mxu0 0.0
  %293 = vmatpush1.msra.mxu0 0.0
  %294 = vmatprep.subr.mxu0 0.0
  %295 = vmatpush1.msra.mxu0 0.0
  %296 = vmatprep.subr.mxu0 0.0
  %297 = vmatpush1.msra.mxu0 0.0
  %298 = vmatprep.subr.mxu0 0.0
  %299 = vmatpush1.msra.mxu0 0.0
  %300 = vmatprep.subr.mxu0 0.0
  %301 = vmatpush1.msra.mxu0 0.0
  %302 = vmatprep.subr.mxu0 0.0
  %303 = vmatpush1.msra.mxu0 0.0
  %304 = vmatprep.subr.mxu0 0.0
  %305 = vmatpush1.msra.mxu0 0.0
  %306 = vmatprep.subr.mxu0 0.0
  %307 = vmatpush1.msra.mxu0 0.0
  %308 = vmatprep.subr.mxu0 0.0
  %309 = vmatpush1.msra.mxu0 0.0
  %310 = vmatprep.subr.mxu0 0.0
  %311 = vmatpush1.msra.mxu0 0.0
  %312 = vmatprep.subr.mxu0 0.0
  %313 = vmatpush1.msra.mxu0 0.0
  %314 = vmatprep.subr.mxu0 0.0
  %315 = vmatpush1.msra.mxu0 0.0
  %316 = vmatprep.subr.mxu0 0.0
  %317 = vmatpush1.msra.mxu0 0.0
  %318 = vmatprep.subr.mxu0 0.0
  %319 = vmatpush1.msra.mxu0 0.0
  %320 = vmatprep.subr.mxu0 0.0
  %321 = vmatpush1.msra.mxu0 0.0
  %322 = vmatprep.subr.mxu0 0.0
  %323 = vmatpush1.msra.mxu0 0.0
  %324 = vmatprep.subr.mxu0 0.0
  %325 = vmatpush1.msra.mxu0 0.0
  %326 = vmatprep.subr.mxu0 0.0
  %327 = vmatpush1.msra.mxu0 0.0
  %328 = vmatprep.subr.mxu0 0.0
  %329 = vmatpush1.msra.mxu0 0.0
  %330 = vmatprep.subr.mxu0 0.0
  %331 = vmatpush1.msra.mxu0 0.0
  %332 = vmatprep.mubr.f32.mxu0 0.0
  %333 = vmatmul.mubr.f32.gmra.mrb[0].mxu0 %v266
  %v334 = vpop.f32.mrb[0].mxu0
  %v335 = vadd.f32 0.0, %v334
  %v336 = vpop.f32.mrb[0].mxu0
  %337 = vdwg.mxu0
  %v338 = vadd.f32 %v264, %v335
  %v339 = vxor.u32 %v338, 2147483648
  %v340 = vmul.f32 %v339, 1.442695
  %v341 = vpow.pop %v340
  %v342 = vadd.f32 %v341, 1.0
  %v343 = vrcp.pop %v342
  %v344 = vmul.f32 1.0, %v343
  %v345 = vtanh.pop %v338
  %347 = vrot.lane.b32.xlu0 %v262, 32
  %v348 = vpop.permute.xlu0 %347
  %v350 = vmul.f32 %v344, %v348
  %352 = vrot.lane.b32.xlu0 %v345, 64
  %v353 = vpop.permute.xlu0 %352
  %v355 = vmul.f32 %v344, %v353
  %357 = vrot.lane.b32.xlu0 %v355, 32
  %v358 = vpop.permute.xlu0 %357
  %v360 = vadd.f32 %v350, %v358
  %v361 = vtanh.pop %v360
  %363 = vrot.lane.b32.xlu0 %v361, 64
  %v364 = vpop.permute.xlu0 %363
  %v366 = vmul.f32 %v344, %v364
  %368 = vrot.lane.b32.xlu0 %v366, 32
  %v369 = vpop.permute.xlu0 %368
  %371 = vst.msk [vmem:[#allocation2] sm:$0x3] %vm135, %v369
  %373 = vrot.lane.b32.xlu0 %v360, 96
  %v374 = vpop.permute.xlu0 %373
  %376 = vst.msk [vmem:[#allocation3] sm:$0x3] %vm135, %v374
  %s377 = scalar_lea.vmem [#allocation4], 4
  %378 = vst.msk [vmem:[%s377] sm:$0x3] %vm135, %v369
  %v379 = vld [vmem:[#allocation2] sm:$0x3]
  %v380 = vld [vmem:[#allocation3] sm:$0x3]
  %s381 = scalar_lea.vmem %s0, 6
  %v382 = vld [vmem:[%s381] sm:$0x3]
  %v384 = vsel %vm28, %v379, 0
  %386 = vmatprep.subr.mxu0 0.0
  %387 = vmatpush1.msra.mxu0 %v21
  %388 = vmatprep.subr.mxu0 0.0
  %389 = vmatpush1.msra.mxu0 %v22
  %390 = vmatprep.subr.mxu0 0.0
  %391 = vmatpush1.msra.mxu0 %v23
  %392 = vmatprep.subr.mxu0 0.0
  %393 = vmatpush1.msra.mxu0 %v24
  %394 = vmatprep.subr.mxu0 0.0
  %395 = vmatpush1.msra.mxu0 0.0
  %396 = vmatprep.subr.mxu0 0.0
  %397 = vmatpush1.msra.mxu0 0.0
  %398 = vmatprep.subr.mxu0 0.0
  %399 = vmatpush1.msra.mxu0 0.0
  %400 = vmatprep.subr.mxu0 0.0
  %401 = vmatpush1.msra.mxu0 0.0
  %402 = vmatprep.subr.mxu0 0.0
  %403 = vmatpush1.msra.mxu0 0.0
  %404 = vmatprep.subr.mxu0 0.0
  %405 = vmatpush1.msra.mxu0 0.0
  %406 = vmatprep.subr.mxu0 0.0
  %407 = vmatpush1.msra.mxu0 0.0
  %408 = vmatprep.subr.mxu0 0.0
  %409 = vmatpush1.msra.mxu0 0.0
  %410 = vmatprep.subr.mxu0 0.0
  %411 = vmatpush1.msra.mxu0 0.0
  %412 = vmatprep.subr.mxu0 0.0
  %413 = vmatpush1.msra.mxu0 0.0
  %414 = vmatprep.subr.mxu0 0.0
  %415 = vmatpush1.msra.mxu0 0.0
  %416 = vmatprep.subr.mxu0 0.0
  %417 = vmatpush1.msra.mxu0 0.0
  %418 = vmatprep.subr.mxu0 0.0
  %419 = vmatpush1.msra.mxu0 0.0
  %420 = vmatprep.subr.mxu0 0.0
  %421 = vmatpush1.msra.mxu0 0.0
  %422 = vmatprep.subr.mxu0 0.0
  %423 = vmatpush1.msra.mxu0 0.0
  %424 = vmatprep.subr.mxu0 0.0
  %425 = vmatpush1.msra.mxu0 0.0
  %426 = vmatprep.subr.mxu0 0.0
  %427 = vmatpush1.msra.mxu0 0.0
  %428 = vmatprep.subr.mxu0 0.0
  %429 = vmatpush1.msra.mxu0 0.0
  %430 = vmatprep.subr.mxu0 0.0
  %431 = vmatpush1.msra.mxu0 0.0
  %432 = vmatprep.subr.mxu0 0.0
  %433 = vmatpush1.msra.mxu0 0.0
  %434 = vmatprep.subr.mxu0 0.0
  %435 = vmatpush1.msra.mxu0 0.0
  %436 = vmatprep.subr.mxu0 0.0
  %437 = vmatpush1.msra.mxu0 0.0
  %438 = vmatprep.subr.mxu0 0.0
  %439 = vmatpush1.msra.mxu0 0.0
  %440 = vmatprep.subr.mxu0 0.0
  %441 = vmatpush1.msra.mxu0 0.0
  %442 = vmatprep.subr.mxu0 0.0
  %443 = vmatpush1.msra.mxu0 0.0
  %444 = vmatprep.subr.mxu0 0.0
  %445 = vmatpush1.msra.mxu0 0.0
  %446 = vmatprep.subr.mxu0 0.0
  %447 = vmatpush1.msra.mxu0 0.0
  %448 = vmatprep.subr.mxu0 0.0
  %449 = vmatpush1.msra.mxu0 0.0
  %450 = vmatprep.mubr.f32.mxu0 0.0
  %451 = vmatmul.mubr.f32.gmra.mrb[0].mxu0 %v384
  %v452 = vpop.f32.mrb[0].mxu0
  %v453 = vadd.f32 0.0, %v452
  %v454 = vpop.f32.mrb[0].mxu0
  %455 = vdwg.mxu0
  %v456 = vadd.f32 %v382, %v453
  %v457 = vxor.u32 %v456, 2147483648
  %v458 = vmul.f32 %v457, 1.442695
  %v459 = vpow.pop %v458
  %v460 = vadd.f32 %v459, 1.0
  %v461 = vrcp.pop %v460
  %v462 = vmul.f32 1.0, %v461
  %v463 = vtanh.pop %v456
  %465 = vrot.lane.b32.xlu0 %v380, 32
  %v466 = vpop.permute.xlu0 %465
  %v468 = vmul.f32 %v462, %v466
  %470 = vrot.lane.b32.xlu0 %v463, 64
  %v471 = vpop.permute.xlu0 %470
  %v473 = vmul.f32 %v462, %v471
  %475 = vrot.lane.b32.xlu0 %v473, 32
  %v476 = vpop.permute.xlu0 %475
  %v478 = vadd.f32 %v468, %v476
  %v479 = vtanh.pop %v478
  %481 = vrot.lane.b32.xlu0 %v479, 64
  %v482 = vpop.permute.xlu0 %481
  %v484 = vmul.f32 %v462, %v482
  %486 = vrot.lane.b32.xlu0 %v484, 32
  %v487 = vpop.permute.xlu0 %486
  %489 = vst.msk [vmem:[#allocation2] sm:$0x3] %vm135, %v487
  %491 = vrot.lane.b32.xlu0 %v478, 96
  %v492 = vpop.permute.xlu0 %491
  %494 = vst.msk [vmem:[#allocation3] sm:$0x3] %vm135, %v492
  %s495 = scalar_lea.vmem [#allocation4], 6
  %496 = vst.msk [vmem:[%s495] sm:$0x3] %vm135, %v487
  %v497 = vld [vmem:[#allocation2] sm:$0x3]
  %v498 = vld [vmem:[#allocation3] sm:$0x3]
  %s499 = scalar_lea.vmem %s0, 8
  %v500 = vld [vmem:[%s499] sm:$0x3]
  %v502 = vsel %vm28, %v497, 0
  %504 = vmatprep.subr.mxu0 0.0
  %505 = vmatpush1.msra.mxu0 %v21
  %506 = vmatprep.subr.mxu0 0.0
  %507 = vmatpush1.msra.mxu0 %v22
  %508 = vmatprep.subr.mxu0 0.0
  %509 = vmatpush1.msra.mxu0 %v23
  %510 = vmatprep.subr.mxu0 0.0
  %511 = vmatpush1.msra.mxu0 %v24
  %512 = vmatprep.subr.mxu0 0.0
  %513 = vmatpush1.msra.mxu0 0.0
  %514 = vmatprep.subr.mxu0 0.0
  %515 = vmatpush1.msra.mxu0 0.0
  %516 = vmatprep.subr.mxu0 0.0
  %517 = vmatpush1.msra.mxu0 0.0
  %518 = vmatprep.subr.mxu0 0.0
  %519 = vmatpush1.msra.mxu0 0.0
  %520 = vmatprep.subr.mxu0 0.0
  %521 = vmatpush1.msra.mxu0 0.0
  %522 = vmatprep.subr.mxu0 0.0
  %523 = vmatpush1.msra.mxu0 0.0
  %524 = vmatprep.subr.mxu0 0.0
  %525 = vmatpush1.msra.mxu0 0.0
  %526 = vmatprep.subr.mxu0 0.0
  %527 = vmatpush1.msra.mxu0 0.0
  %528 = vmatprep.subr.mxu0 0.0
  %529 = vmatpush1.msra.mxu0 0.0
  %530 = vmatprep.subr.mxu0 0.0
  %531 = vmatpush1.msra.mxu0 0.0
  %532 = vmatprep.subr.mxu0 0.0
  %533 = vmatpush1.msra.mxu0 0.0
  %534 = vmatprep.subr.mxu0 0.0
  %535 = vmatpush1.msra.mxu0 0.0
  %536 = vmatprep.subr.mxu0 0.0
  %537 = vmatpush1.msra.mxu0 0.0
  %538 = vmatprep.subr.mxu0 0.0
  %539 = vmatpush1.msra.mxu0 0.0
  %540 = vmatprep.subr.mxu0 0.0
  %541 = vmatpush1.msra.mxu0 0.0
  %542 = vmatprep.subr.mxu0 0.0
  %543 = vmatpush1.msra.mxu0 0.0
  %544 = vmatprep.subr.mxu0 0.0
  %545 = vmatpush1.msra.mxu0 0.0
  %546 = vmatprep.subr.mxu0 0.0
  %547 = vmatpush1.msra.mxu0 0.0
  %548 = vmatprep.subr.mxu0 0.0
  %549 = vmatpush1.msra.mxu0 0.0
  %550 = vmatprep.subr.mxu0 0.0
  %551 = vmatpush1.msra.mxu0 0.0
  %552 = vmatprep.subr.mxu0 0.0
  %553 = vmatpush1.msra.mxu0 0.0
  %554 = vmatprep.subr.mxu0 0.0
  %555 = vmatpush1.msra.mxu0 0.0
  %556 = vmatprep.subr.mxu0 0.0
  %557 = vmatpush1.msra.mxu0 0.0
  %558 = vmatprep.subr.mxu0 0.0
  %559 = vmatpush1.msra.mxu0 0.0
  %560 = vmatprep.subr.mxu0 0.0
  %561 = vmatpush1.msra.mxu0 0.0
  %562 = vmatprep.subr.mxu0 0.0
  %563 = vmatpush1.msra.mxu0 0.0
  %564 = vmatprep.subr.mxu0 0.0
  %565 = vmatpush1.msra.mxu0 0.0
  %566 = vmatprep.subr.mxu0 0.0
  %567 = vmatpush1.msra.mxu0 0.0
  %568 = vmatprep.mubr.f32.mxu0 0.0
  %569 = vmatmul.mubr.f32.gmra.mrb[0].mxu0 %v502
  %v570 = vpop.f32.mrb[0].mxu0
  %v571 = vadd.f32 0.0, %v570
  %v572 = vpop.f32.mrb[0].mxu0
  %573 = vdwg.mxu0
  %v574 = vadd.f32 %v500, %v571
  %v575 = vxor.u32 %v574, 2147483648
  %v576 = vmul.f32 %v575, 1.442695
  %v577 = vpow.pop %v576
  %v578 = vadd.f32 %v577, 1.0
  %v579 = vrcp.pop %v578
  %v580 = vmul.f32 1.0, %v579
  %v581 = vtanh.pop %v574
  %583 = vrot.lane.b32.xlu0 %v498, 32
  %v584 = vpop.permute.xlu0 %583
  %v586 = vmul.f32 %v580, %v584
  %588 = vrot.lane.b32.xlu0 %v581, 64
  %v589 = vpop.permute.xlu0 %588
  %v591 = vmul.f32 %v580, %v589
  %593 = vrot.lane.b32.xlu0 %v591, 32
  %v594 = vpop.permute.xlu0 %593
  %v596 = vadd.f32 %v586, %v594
  %v597 = vtanh.pop %v596
  %599 = vrot.lane.b32.xlu0 %v597, 64
  %v600 = vpop.permute.xlu0 %599
  %v602 = vmul.f32 %v580, %v600
  %604 = vrot.lane.b32.xlu0 %v602, 32
  %v605 = vpop.permute.xlu0 %604
  %607 = vst.msk [vmem:[#allocation2] sm:$0x3] %vm135, %v605
  %609 = vrot.lane.b32.xlu0 %v596, 96
  %v610 = vpop.permute.xlu0 %609
  %612 = vst.msk [vmem:[#allocation3] sm:$0x3] %vm135, %v610
  %s613 = scalar_lea.vmem [#allocation4], 8
  %614 = vst.msk [vmem:[%s613] sm:$0x3] %vm135, %v605
  %v615 = vld [vmem:[#allocation2] sm:$0x3]
  %v616 = vld [vmem:[#allocation3] sm:$0x3]
  %s617 = scalar_lea.vmem %s0, 10
  %v618 = vld [vmem:[%s617] sm:$0x3]
  %v620 = vsel %vm28, %v615, 0
  %622 = vmatprep.subr.mxu0 0.0
  %623 = vmatpush1.msra.mxu0 %v21
  %624 = vmatprep.subr.mxu0 0.0
  %625 = vmatpush1.msra.mxu0 %v22
  %626 = vmatprep.subr.mxu0 0.0
  %627 = vmatpush1.msra.mxu0 %v23
  %628 = vmatprep.subr.mxu0 0.0
  %629 = vmatpush1.msra.mxu0 %v24
  %630 = vmatprep.subr.mxu0 0.0
  %631 = vmatpush1.msra.mxu0 0.0
  %632 = vmatprep.subr.mxu0 0.0
  %633 = vmatpush1.msra.mxu0 0.0
  %634 = vmatprep.subr.mxu0 0.0
  %635 = vmatpush1.msra.mxu0 0.0
  %636 = vmatprep.subr.mxu0 0.0
  %637 = vmatpush1.msra.mxu0 0.0
  %638 = vmatprep.subr.mxu0 0.0
  %639 = vmatpush1.msra.mxu0 0.0
  %640 = vmatprep.subr.mxu0 0.0
  %641 = vmatpush1.msra.mxu0 0.0
  %642 = vmatprep.subr.mxu0 0.0
  %643 = vmatpush1.msra.mxu0 0.0
  %644 = vmatprep.subr.mxu0 0.0
  %645 = vmatpush1.msra.mxu0 0.0
  %646 = vmatprep.subr.mxu0 0.0
  %647 = vmatpush1.msra.mxu0 0.0
  %648 = vmatprep.subr.mxu0 0.0
  %649 = vmatpush1.msra.mxu0 0.0
  %650 = vmatprep.subr.mxu0 0.0
  %651 = vmatpush1.msra.mxu0 0.0
  %652 = vmatprep.subr.mxu0 0.0
  %653 = vmatpush1.msra.mxu0 0.0
  %654 = vmatprep.subr.mxu0 0.0
  %655 = vmatpush1.msra.mxu0 0.0
  %656 = vmatprep.subr.mxu0 0.0
  %657 = vmatpush1.msra.mxu0 0.0
  %658 = vmatprep.subr.mxu0 0.0
  %659 = vmatpush1.msra.mxu0 0.0
  %660 = vmatprep.subr.mxu0 0.0
  %661 = vmatpush1.msra.mxu0 0.0
  %662 = vmatprep.subr.mxu0 0.0
  %663 = vmatpush1.msra.mxu0 0.0
  %664 = vmatprep.subr.mxu0 0.0
  %665 = vmatpush1.msra.mxu0 0.0
  %666 = vmatprep.subr.mxu0 0.0
  %667 = vmatpush1.msra.mxu0 0.0
  %668 = vmatprep.subr.mxu0 0.0
  %669 = vmatpush1.msra.mxu0 0.0
  %670 = vmatprep.subr.mxu0 0.0
  %671 = vmatpush1.msra.mxu0 0.0
  %672 = vmatprep.subr.mxu0 0.0
  %673 = vmatpush1.msra.mxu0 0.0
  %674 = vmatprep.subr.mxu0 0.0
  %675 = vmatpush1.msra.mxu0 0.0
  %676 = vmatprep.subr.mxu0 0.0
  %677 = vmatpush1.msra.mxu0 0.0
  %678 = vmatprep.subr.mxu0 0.0
  %679 = vmatpush1.msra.mxu0 0.0
  %680 = vmatprep.subr.mxu0 0.0
  %681 = vmatpush1.msra.mxu0 0.0
  %682 = vmatprep.subr.mxu0 0.0
  %683 = vmatpush1.msra.mxu0 0.0
  %684 = vmatprep.subr.mxu0 0.0
  %685 = vmatpush1.msra.mxu0 0.0
  %686 = vmatprep.mubr.f32.mxu0 0.0
  %687 = vmatmul.mubr.f32.gmra.mrb[0].mxu0 %v620
  %v688 = vpop.f32.mrb[0].mxu0
  %v689 = vadd.f32 0.0, %v688
  %v690 = vpop.f32.mrb[0].mxu0
  %691 = vdwg.mxu0
  %v692 = vadd.f32 %v618, %v689
  %v693 = vxor.u32 %v692, 2147483648
  %v694 = vmul.f32 %v693, 1.442695
  %v695 = vpow.pop %v694
  %v696 = vadd.f32 %v695, 1.0
  %v697 = vrcp.pop %v696
  %v698 = vmul.f32 1.0, %v697
  %v699 = vtanh.pop %v692
  %701 = vrot.lane.b32.xlu0 %v616, 32
  %v702 = vpop.permute.xlu0 %701
  %v704 = vmul.f32 %v698, %v702
  %706 = vrot.lane.b32.xlu0 %v699, 64
  %v707 = vpop.permute.xlu0 %706
  %v709 = vmul.f32 %v698, %v707
  %711 = vrot.lane.b32.xlu0 %v709, 32
  %v712 = vpop.permute.xlu0 %711
  %v714 = vadd.f32 %v704, %v712
  %v715 = vtanh.pop %v714
  %717 = vrot.lane.b32.xlu0 %v715, 64
  %v718 = vpop.permute.xlu0 %717
  %v720 = vmul.f32 %v698, %v718
  %722 = vrot.lane.b32.xlu0 %v720, 32
  %v723 = vpop.permute.xlu0 %722
  %725 = vst.msk [vmem:[#allocation2] sm:$0x3] %vm135, %v723
  %727 = vrot.lane.b32.xlu0 %v714, 96
  %v728 = vpop.permute.xlu0 %727
  %730 = vst.msk [vmem:[#allocation3] sm:$0x3] %vm135, %v728
  %s731 = scalar_lea.vmem [#allocation4], 10
  %732 = vst.msk [vmem:[%s731] sm:$0x3] %vm135, %v723
  %v733 = vld [vmem:[#allocation2] sm:$0x3]
  %v734 = vld [vmem:[#allocation3] sm:$0x3]
  %s735 = scalar_lea.vmem %s0, 12
  %v736 = vld [vmem:[%s735] sm:$0x3]
  %v738 = vsel %vm28, %v733, 0
  %740 = vmatprep.subr.mxu0 0.0
  %741 = vmatpush1.msra.mxu0 %v21
  %742 = vmatprep.subr.mxu0 0.0
  %743 = vmatpush1.msra.mxu0 %v22
  %744 = vmatprep.subr.mxu0 0.0
  %745 = vmatpush1.msra.mxu0 %v23
  %746 = vmatprep.subr.mxu0 0.0
  %747 = vmatpush1.msra.mxu0 %v24
  %748 = vmatprep.subr.mxu0 0.0
  %749 = vmatpush1.msra.mxu0 0.0
  %750 = vmatprep.subr.mxu0 0.0
  %751 = vmatpush1.msra.mxu0 0.0
  %752 = vmatprep.subr.mxu0 0.0
  %753 = vmatpush1.msra.mxu0 0.0
  %754 = vmatprep.subr.mxu0 0.0
  %755 = vmatpush1.msra.mxu0 0.0
  %756 = vmatprep.subr.mxu0 0.0
  %757 = vmatpush1.msra.mxu0 0.0
  %758 = vmatprep.subr.mxu0 0.0
  %759 = vmatpush1.msra.mxu0 0.0
  %760 = vmatprep.subr.mxu0 0.0
  %761 = vmatpush1.msra.mxu0 0.0
  %762 = vmatprep.subr.mxu0 0.0
  %763 = vmatpush1.msra.mxu0 0.0
  %764 = vmatprep.subr.mxu0 0.0
  %765 = vmatpush1.msra.mxu0 0.0
  %766 = vmatprep.subr.mxu0 0.0
  %767 = vmatpush1.msra.mxu0 0.0
  %768 = vmatprep.subr.mxu0 0.0
  %769 = vmatpush1.msra.mxu0 0.0
  %770 = vmatprep.subr.mxu0 0.0
  %771 = vmatpush1.msra.mxu0 0.0
  %772 = vmatprep.subr.mxu0 0.0
  %773 = vmatpush1.msra.mxu0 0.0
  %774 = vmatprep.subr.mxu0 0.0
  %775 = vmatpush1.msra.mxu0 0.0
  %776 = vmatprep.subr.mxu0 0.0
  %777 = vmatpush1.msra.mxu0 0.0
  %778 = vmatprep.subr.mxu0 0.0
  %779 = vmatpush1.msra.mxu0 0.0
  %780 = vmatprep.subr.mxu0 0.0
  %781 = vmatpush1.msra.mxu0 0.0
  %782 = vmatprep.subr.mxu0 0.0
  %783 = vmatpush1.msra.mxu0 0.0
  %784 = vmatprep.subr.mxu0 0.0
  %785 = vmatpush1.msra.mxu0 0.0
  %786 = vmatprep.subr.mxu0 0.0
  %787 = vmatpush1.msra.mxu0 0.0
  %788 = vmatprep.subr.mxu0 0.0
  %789 = vmatpush1.msra.mxu0 0.0
  %790 = vmatprep.subr.mxu0 0.0
  %791 = vmatpush1.msra.mxu0 0.0
  %792 = vmatprep.subr.mxu0 0.0
  %793 = vmatpush1.msra.mxu0 0.0
  %794 = vmatprep.subr.mxu0 0.0
  %795 = vmatpush1.msra.mxu0 0.0
  %796 = vmatprep.subr.mxu0 0.0
  %797 = vmatpush1.msra.mxu0 0.0
  %798 = vmatprep.subr.mxu0 0.0
  %799 = vmatpush1.msra.mxu0 0.0
  %800 = vmatprep.subr.mxu0 0.0
  %801 = vmatpush1.msra.mxu0 0.0
  %802 = vmatprep.subr.mxu0 0.0
  %803 = vmatpush1.msra.mxu0 0.0
  %804 = vmatprep.mubr.f32.mxu0 0.0
  %805 = vmatmul.mubr.f32.gmra.mrb[0].mxu0 %v738
  %v806 = vpop.f32.mrb[0].mxu0
  %v807 = vadd.f32 0.0, %v806
  %v808 = vpop.f32.mrb[0].mxu0
  %809 = vdwg.mxu0
  %v810 = vadd.f32 %v736, %v807
  %v811 = vxor.u32 %v810, 2147483648
  %v812 = vmul.f32 %v811, 1.442695
  %v813 = vpow.pop %v812
  %v814 = vadd.f32 %v813, 1.0
  %v815 = vrcp.pop %v814
  %v816 = vmul.f32 1.0, %v815
  %v817 = vtanh.pop %v810
  %819 = vrot.lane.b32.xlu0 %v734, 32
  %v820 = vpop.permute.xlu0 %819
  %v822 = vmul.f32 %v816, %v820
  %824 = vrot.lane.b32.xlu0 %v817, 64
  %v825 = vpop.permute.xlu0 %824
  %v827 = vmul.f32 %v816, %v825
  %829 = vrot.lane.b32.xlu0 %v827, 32
  %v830 = vpop.permute.xlu0 %829
  %v832 = vadd.f32 %v822, %v830
  %v833 = vtanh.pop %v832
  %835 = vrot.lane.b32.xlu0 %v833, 64
  %v836 = vpop.permute.xlu0 %835
  %v838 = vmul.f32 %v816, %v836
  %840 = vrot.lane.b32.xlu0 %v838, 32
  %v841 = vpop.permute.xlu0 %840
  %843 = vst.msk [vmem:[#allocation2] sm:$0x3] %vm135, %v841
  %845 = vrot.lane.b32.xlu0 %v832, 96
  %v846 = vpop.permute.xlu0 %845
  %848 = vst.msk [vmem:[#allocation3] sm:$0x3] %vm135, %v846
  %s849 = scalar_lea.vmem [#allocation4], 12
  %850 = vst.msk [vmem:[%s849] sm:$0x3] %vm135, %v841
  %v851 = vld [vmem:[#allocation2] sm:$0x3]
  %v852 = vld [vmem:[#allocation3] sm:$0x3]
  %s853 = scalar_lea.vmem %s0, 14
  %v854 = vld [vmem:[%s853] sm:$0x3]
  %v856 = vsel %vm28, %v851, 0
  %858 = vmatprep.subr.mxu0 0.0
  %859 = vmatpush1.msra.mxu0 %v21
  %860 = vmatprep.subr.mxu0 0.0
  %861 = vmatpush1.msra.mxu0 %v22
  %862 = vmatprep.subr.mxu0 0.0
  %863 = vmatpush1.msra.mxu0 %v23
  %864 = vmatprep.subr.mxu0 0.0
  %865 = vmatpush1.msra.mxu0 %v24
  %866 = vmatprep.subr.mxu0 0.0
  %867 = vmatpush1.msra.mxu0 0.0
  %868 = vmatprep.subr.mxu0 0.0
  %869 = vmatpush1.msra.mxu0 0.0
  %870 = vmatprep.subr.mxu0 0.0
  %871 = vmatpush1.msra.mxu0 0.0
  %872 = vmatprep.subr.mxu0 0.0
  %873 = vmatpush1.msra.mxu0 0.0
  %874 = vmatprep.subr.mxu0 0.0
  %875 = vmatpush1.msra.mxu0 0.0
  %876 = vmatprep.subr.mxu0 0.0
  %877 = vmatpush1.msra.mxu0 0.0
  %878 = vmatprep.subr.mxu0 0.0
  %879 = vmatpush1.msra.mxu0 0.0
  %880 = vmatprep.subr.mxu0 0.0
  %881 = vmatpush1.msra.mxu0 0.0
  %882 = vmatprep.subr.mxu0 0.0
  %883 = vmatpush1.msra.mxu0 0.0
  %884 = vmatprep.subr.mxu0 0.0
  %885 = vmatpush1.msra.mxu0 0.0
  %886 = vmatprep.subr.mxu0 0.0
  %887 = vmatpush1.msra.mxu0 0.0
  %888 = vmatprep.subr.mxu0 0.0
  %889 = vmatpush1.msra.mxu0 0.0
  %890 = vmatprep.subr.mxu0 0.0
  %891 = vmatpush1.msra.mxu0 0.0
  %892 = vmatprep.subr.mxu0 0.0
  %893 = vmatpush1.msra.mxu0 0.0
  %894 = vmatprep.subr.mxu0 0.0
  %895 = vmatpush1.msra.mxu0 0.0
  %896 = vmatprep.subr.mxu0 0.0
  %897 = vmatpush1.msra.mxu0 0.0
  %898 = vmatprep.subr.mxu0 0.0
  %899 = vmatpush1.msra.mxu0 0.0
  %900 = vmatprep.subr.mxu0 0.0
  %901 = vmatpush1.msra.mxu0 0.0
  %902 = vmatprep.subr.mxu0 0.0
  %903 = vmatpush1.msra.mxu0 0.0
  %904 = vmatprep.subr.mxu0 0.0
  %905 = vmatpush1.msra.mxu0 0.0
  %906 = vmatprep.subr.mxu0 0.0
  %907 = vmatpush1.msra.mxu0 0.0
  %908 = vmatprep.subr.mxu0 0.0
  %909 = vmatpush1.msra.mxu0 0.0
  %910 = vmatprep.subr.mxu0 0.0
  %911 = vmatpush1.msra.mxu0 0.0
  %912 = vmatprep.subr.mxu0 0.0
  %913 = vmatpush1.msra.mxu0 0.0
  %914 = vmatprep.subr.mxu0 0.0
  %915 = vmatpush1.msra.mxu0 0.0
  %916 = vmatprep.subr.mxu0 0.0
  %917 = vmatpush1.msra.mxu0 0.0
  %918 = vmatprep.subr.mxu0 0.0
  %919 = vmatpush1.msra.mxu0 0.0
  %920 = vmatprep.subr.mxu0 0.0
  %921 = vmatpush1.msra.mxu0 0.0
  %922 = vmatprep.mubr.f32.mxu0 0.0
  %923 = vmatmul.mubr.f32.gmra.mrb[0].mxu0 %v856
  %v924 = vpop.f32.mrb[0].mxu0
  %v925 = vadd.f32 0.0, %v924
  %v926 = vpop.f32.mrb[0].mxu0
  %927 = vdwg.mxu0
  %v928 = vadd.f32 %v854, %v925
  %v929 = vxor.u32 %v928, 2147483648
  %v930 = vmul.f32 %v929, 1.442695
  %v931 = vpow.pop %v930
  %v932 = vadd.f32 %v931, 1.0
  %v933 = vrcp.pop %v932
  %v934 = vmul.f32 1.0, %v933
  %v935 = vtanh.pop %v928
  %937 = vrot.lane.b32.xlu0 %v852, 32
  %v938 = vpop.permute.xlu0 %937
  %v940 = vmul.f32 %v934, %v938
  %942 = vrot.lane.b32.xlu0 %v935, 64
  %v943 = vpop.permute.xlu0 %942
  %v945 = vmul.f32 %v934, %v943
  %947 = vrot.lane.b32.xlu0 %v945, 32
  %v948 = vpop.permute.xlu0 %947
  %v950 = vadd.f32 %v940, %v948
  %v951 = vtanh.pop %v950
  %953 = vrot.lane.b32.xlu0 %v951, 64
  %v954 = vpop.permute.xlu0 %953
  %v956 = vmul.f32 %v934, %v954
  %958 = vrot.lane.b32.xlu0 %v956, 32
  %v959 = vpop.permute.xlu0 %958
  %961 = vst.msk [vmem:[#allocation2] sm:$0x3] %vm135, %v959
  %963 = vrot.lane.b32.xlu0 %v950, 96
  %v964 = vpop.permute.xlu0 %963
  %966 = vst.msk [vmem:[#allocation3] sm:$0x3] %vm135, %v964
  %s967 = scalar_lea.vmem [#allocation4], 14
  %968 = vst.msk [vmem:[%s967] sm:$0x3] %vm135, %v959
  %v969 = vld [vmem:[#allocation4] sm:$0x3]
  %v970 = vld [vmem:[#allocation4 + $0x2] sm:$0x3]
  %v971 = vld [vmem:[#allocation4 + $0x4] sm:$0x3]
  %v972 = vld [vmem:[#allocation4 + $0x6] sm:$0x3]
  %v973 = vld [vmem:[#allocation4 + $0x8] sm:$0x3]
  %v974 = vld [vmem:[#allocation4 + $0xa] sm:$0x3]
  %v975 = vld [vmem:[#allocation4 + $0xc] sm:$0x3]
  %v976 = vld [vmem:[#allocation4 + $0xe] sm:$0x3]
  %977 = vst.msk [vmem:[%s2] sm:$0x3] %vm135, %v969
  %978 = vst.msk [vmem:[%s2 + $0x2] sm:$0x3] %vm135, %v970
  %979 = vst.msk [vmem:[%s2 + $0x4] sm:$0x3] %vm135, %v971
  %980 = vst.msk [vmem:[%s2 + $0x6] sm:$0x3] %vm135, %v972
  %981 = vst.msk [vmem:[%s2 + $0x8] sm:$0x3] %vm135, %v973
  %982 = vst.msk [vmem:[%s2 + $0xa] sm:$0x3] %vm135, %v974
  %983 = vst.msk [vmem:[%s2 + $0xc] sm:$0x3] %vm135, %v975
  %984 = vst.msk [vmem:[%s2 + $0xe] sm:$0x3] %vm135, %v976
  // Predicated region
  $region14: #{base_model_forward.6} parent=0 // pred_check
    %p985 = pneg %p14
  $region15: #{base_model_forward.6} parent=0 // pred_check_branch
    %987 = sbr.rel (%p985) target = $region17
  $region16: #{base_model_forward.6} parent=0 // pred_region
    %v988 = vld [vmem:[#allocation2] sm:$0x3]
    %989 = vst.msk [vmem:[%s3] sm:$0x3] %vm135, %v988
    %v990 = vld [vmem:[#allocation3] sm:$0x3]
    %991 = vst.msk [vmem:[%s4] sm:$0x3] %vm135, %v990
  $region17: #{base_model_forward.6} parent=0 // pred_fallthru
    _
  // Predicated region
  $region18: #{base_model_forward.6} parent=0 // pred_check
    _
  $region19: #{base_model_forward.6} parent=0 // pred_check_branch
    %993 = sbr.rel (0) target = $region21
  $region20: #{base_model_forward.6} parent=0 // pred_region
    _
  $region21: #{base_model_forward.6} parent=0 // pred_fallthru
    _
  // Predicated region
  $region22: #{base_model_forward.6} parent=0 // pred_check
    _
  $region23: #{base_model_forward.6} parent=0 // pred_check_branch
    %995 = sbr.rel (0) target = $region25
  $region24: #{base_model_forward.6} parent=0 // pred_region
    _
  $region25: #{base_model_forward.6} parent=0 // pred_fallthru
    _
  // Predicated region
  $region26: #{base_model_forward.6} parent=0 // pred_check
    _
  $region27: #{base_model_forward.6} parent=0 // pred_check_branch
    %997 = sbr.rel (0) target = $region29
  $region28: #{base_model_forward.6} parent=0 // pred_region
    _
  $region29: #{base_model_forward.6} parent=0 // pred_fallthru
    _
  // Predicated region
  $region30: #{base_model_forward.6} parent=0 // pred_check
    _
  $region31: #{base_model_forward.6} parent=0 // pred_check_branch
    %999 = sbr.rel (0) target = $region33
  $region32: #{base_model_forward.6} parent=0 // pred_region
    _
  $region33: #{base_model_forward.6} parent=0 // pred_fallthru
    _
  // Predicated region
  $region34: #{base_model_forward.6} parent=0 // pred_check
    _
  $region35: #{base_model_forward.6} parent=0 // pred_check_branch
    %1001 = sbr.rel (0) target = $region37
  $region36: #{base_model_forward.6} parent=0 // pred_region
    _
  $region37: #{base_model_forward.6} parent=0 // pred_fallthru
    _
  // Predicated region
  $region38: #{base_model_forward.6} parent=0 // pred_check
    _
  $region39: #{base_model_forward.6} parent=0 // pred_check_branch
    %1003 = sbr.rel (0) target = $region41
  $region40: #{base_model_forward.6} parent=0 // pred_region
    _
  $region41: #{base_model_forward.6} parent=0 // pred_fallthru
    _

</llo_original>
